<compile_context>
chip_gen: v6e
topology: v6e:2x2x1
jax: 0.10.0
libtpu: 0.0.40
codegen_flags: <defaults>
</compile_context>

<pallas_src>
import functools
import math

import jax
import jax.numpy as jnp
from jax import lax
from jax.experimental import pallas as pl
from jax.experimental.pallas import tpu as pltpu

NEG_SLOPE = 0.01      # nn.LeakyReLU default
BN_EPS = 1e-5
HW = 16               # spatial size after layer1's first conv
P = HW * HW           # 256 flattened positions per image
SPAD = 24             # fallback-path padding (8-aligned, covers |off| <= 17)


# ----------------------------- kernel helpers ------------------------------ #
def _leaky(x):
    return jnp.where(x > 0, x, NEG_SLOPE * x)


# --------------------------------- kernel ---------------------------------- #
def _make_kernel(NB, use_roll, roll_sign):
    M = NB * P

    def shift_rows(y, off):
        # Returns z with z[p] = y[p + off].  Wrapped / cross-image rows are
        # finite and are zeroed by the caller's destination-row mask (or are
        # never selected, for layer 3).
        if off == 0:
            return y
        if use_roll:
            return pltpu.roll(y, (roll_sign * -off) % M, axis=0)
        # Fallback: 8-aligned zero-pad + static slice.
        z = jnp.zeros((SPAD, y.shape[1]), jnp.float32)
        yp = jnp.concatenate([z, y, z], axis=0)
        return yp[SPAD + off:SPAD + off + M, :]

    def kernel(x1_ref, w1a_ref, w1b_ref, w2_ref, w3_ref, vec_ref, sel_ref,
               o_ref):
        x1 = x1_ref[...]                       # (M, 19): [16 pixels | 1 | tt | mm]

        # --- layer1 conv-a: 4->64 k2 s2 as one matmul on space-to-depth
        #     patches.  Bias folded through the ones column of x1.
        h = jnp.dot(x1, w1a_ref[...], preferred_element_type=jnp.float32)  # (M,64)
        h = _leaky(h)
        h = h * vec_ref[0:1, 0:64] + vec_ref[1:2, 0:64]        # BN1a (eval, folded)

        # --- destination-row boundary masks (period 256), shared by both 3x3
        #     convs; they also kill roll wraparound and cross-image bleed.
        pm = lax.broadcasted_iota(jnp.int32, (M, 1), 0) & (P - 1)
        hh = pm >> 4
        ww = pm & (HW - 1)
        masks = [(hh + dy >= 0) & (hh + dy < HW) & (ww + dx >= 0) & (ww + dx < HW)
                 for dy in (-1, 0, 1) for dx in (-1, 0, 1)]

        def conv3x3(x, w_ref, bias):
            # 'same' 3x3 conv on flattened 16x16 maps: per-tap matmul on the
            # UNSHIFTED input, then shift + mask the (M, 32) output (mask
            # commutes with the dot because it is per destination row).
            acc = jnp.zeros((M, 32), jnp.float32) + bias
            for tap in range(9):
                dy, dx = tap // 3 - 1, tap % 3 - 1
                off = HW * dy + dx
                y = jnp.dot(x, w_ref[tap], preferred_element_type=jnp.float32)
                acc = acc + jnp.where(masks[tap], shift_rows(y, off), 0.0)
            return acc

        # --- layer1 conv-b: 64->32 k3 s1 p1
        h1 = _leaky(conv3x3(h, w1b_ref, vec_ref[2:3, 0:32]))
        imim = h1 * vec_ref[3:4, 0:32] + vec_ref[4:5, 0:32]

        # --- layer2: concat broadcast tt/mm channels (cols 17:19 of x1) ->
        #     34 ch, conv 34->32 k3 p1, LeakyReLU, BN, + residual.
        x2 = jnp.concatenate([imim, x1[:, 17:19]], axis=1)                 # (M, 34)
        h2 = _leaky(conv3x3(x2, w2_ref, vec_ref[5:6, 0:32]))
        h2 = h2 * vec_ref[6:7, 0:32] + vec_ref[7:8, 0:32]
        h2 = h2 + imim

        # --- layer3: 32->32 k2 s2, dense taps (no masks needed: the stride-2
        #     rows selected below never read past an image boundary, and
        #     wrapped rows are never selected).
        acc3 = jnp.zeros((M, 32), jnp.float32)
        for tap in range(4):
            dy, dx = tap // 2, tap % 2
            off = HW * dy + dx
            y = jnp.dot(h2, w3_ref[tap], preferred_element_type=jnp.float32)
            acc3 = acc3 + shift_rows(y, off)

        # --- stride-2 selection BEFORE the epilogue (exact: row selection
        #     commutes with elementwise ops); LeakyReLU + BN3 only touch the
        #     selected (64, 32) rows per image.  Output stores are (64, 32).
        sel = sel_ref[...]                                                  # (64, 256)
        for i in range(NB):
            y = jnp.dot(sel, acc3[i * P:(i + 1) * P, :],
                        preferred_element_type=jnp.float32)                # (64, 32)
            y = _leaky(y + vec_ref[8:9, 0:32])
            y = y * vec_ref[9:10, 0:32] + vec_ref[10:11, 0:32]
            o_ref[i * 64:(i + 1) * 64, :] = y

    return kernel


# ----------------------- runtime feature detection ------------------------- #
def probe_roll_support():
    """Detect pltpu.roll availability and its shift convention.

    Must be called OUTSIDE jit (it reads a concrete value).
    """
    def k(x_ref, o_ref):
        o_ref[...] = pltpu.roll(x_ref[...], 1, axis=0)

    try:
        x = jnp.tile(jnp.arange(8, dtype=jnp.float32)[:, None], (1, 128))
        y = pl.pallas_call(
            k, out_shape=jax.ShapeDtypeStruct((8, 128), jnp.float32))(x)
        v = float(y[1, 0])
        if v == 0.0:      # jnp.roll convention: out[i] = x[i - shift]
            return True, 1
        if v == 2.0:      # opposite convention: out[i] = x[i + shift]
            return True, -1
    except Exception:
        pass
    return False, 1       # fall back to 8-aligned pad+slice shifts


def tensorcores_per_chip():
    try:
        kind = jax.devices()[0].device_kind.lower()
    except Exception:
        return 1
    # v7x / v4-class chips expose two TensorCores per chip; v5e/v6e have one.
    return 2 if ("v7" in kind or "v4" in kind) else 1


# ------------------------------ parameter init ----------------------------- #
def init_params(key):
    ks = jax.random.split(key, 12)

    def conv_w(k, o, c, kh, kw):
        bound = 1.0 / math.sqrt(c * kh * kw)
        return jax.random.uniform(k, (o, c, kh, kw), jnp.float32, -bound, bound)

    def conv_b(k, o, c, kh, kw):
        bound = 1.0 / math.sqrt(c * kh * kw)
        return jax.random.uniform(k, (o,), jnp.float32, -bound, bound)

    def bn(k, c):
        k1, k2, k3, k4 = jax.random.split(k, 4)
        gamma = jax.random.uniform(k1, (c,), jnp.float32, 0.5, 1.5)
        beta = 0.1 * jax.random.normal(k2, (c,), jnp.float32)
        mean = 0.1 * jax.random.normal(k3, (c,), jnp.float32)
        var = jax.random.uniform(k4, (c,), jnp.float32, 0.5, 1.5)
        return (gamma, beta, mean, var)

    p = {}
    p["w1a"], p["b1a"] = conv_w(ks[0], 64, 4, 2, 2), conv_b(ks[1], 64, 4, 2, 2)
    p["bn1a"] = bn(ks[2], 64)
    p["w1b"], p["b1b"] = conv_w(ks[3], 32, 64, 3, 3), conv_b(ks[4], 32, 64, 3, 3)
    p["bn1b"] = bn(ks[5], 32)
    p["w2"], p["b2"] = conv_w(ks[6], 32, 34, 3, 3), conv_b(ks[7], 32, 34, 3, 3)
    p["bn2"] = bn(ks[8], 32)
    p["w3"], p["b3"] = conv_w(ks[9], 32, 32, 2, 2), conv_b(ks[10], 32, 32, 2, 2)
    p["bn3"] = bn(ks[11], 32)
    return p


def _bn_fold(bnp):
    g, b, mu, var = bnp
    scale = g / jnp.sqrt(var + BN_EPS)
    shift = b - mu * scale
    return scale, shift


def _row128(v):
    v = jnp.asarray(v, jnp.float32).reshape(-1)
    return jnp.pad(v, (0, 128 - v.shape[0]))


# --------------------------------- wrapper --------------------------------- #
def multisensory_fusion(r, d, m, t, params, *, use_roll=False, roll_sign=1,
                        num_tc=1):
    B, S = t.shape
    N = B * S

    # norm_vec with global min/max (m, t) -- tiny reductions, done as glue
    def norm_minmax(v):
        lo, hi = jnp.min(v), jnp.max(v)
        return 2.0 * (v - lo) / (hi - lo) - 1.0

    m_n = norm_minmax(m).reshape(N, HW)
    t_n = norm_minmax(t).reshape(N)

    # im = cat((r, d), channel), normalized [0,255] -> [-1,1]
    im = jnp.concatenate([r, d], axis=2).reshape(N, 4, 32, 32) * (2.0 / 255.0) - 1.0
    # space-to-depth patches for the k=2 s=2 conv, patch channel order (c, ky, kx)
    x_s2d = im.reshape(N, 4, 16, 2, 16, 2).transpose(0, 2, 4, 1, 3, 5).reshape(N, P, 16)

    ones = jnp.ones((N, P, 1), jnp.float32)
    tmap = jnp.broadcast_to(t_n[:, None, None], (N, P, 1))
    mmap = jnp.broadcast_to(m_n[:, None, :], (N, HW, HW)).reshape(N, P, 1)
    # fused per-position input: pixels | ones (bias column) | tt | mm  -> (N*P, 19)
    x1 = jnp.concatenate([x_s2d, ones, tmap, mmap], axis=2).astype(jnp.float32)
    x1 = x1.reshape(N * P, 19)

    # re-pack weights: conv1a folded with its bias (ones column), 3x3/2x2 convs
    # as per-tap (taps, Cin, Cout); all bias/BN vectors packed into one array.
    w1a = jnp.concatenate([params["w1a"].reshape(64, 16).T,            # (16, 64)
                           params["b1a"].reshape(1, 64),               # bias row
                           jnp.zeros((2, 64), jnp.float32)], axis=0)   # tt/mm rows
    w1b = params["w1b"].transpose(2, 3, 1, 0).reshape(9, 64, 32)
    w2 = params["w2"].transpose(2, 3, 1, 0).reshape(9, 34, 32)
    w3 = params["w3"].transpose(2, 3, 1, 0).reshape(4, 32, 32)

    s1a, h1a = _bn_fold(params["bn1a"])
    s1b, h1b = _bn_fold(params["bn1b"])
    s2, h2s = _bn_fold(params["bn2"])
    s3, h3s = _bn_fold(params["bn3"])
    vecs = jnp.stack([_row128(s1a), _row128(h1a),
                      _row128(params["b1b"]), _row128(s1b), _row128(h1b),
                      _row128(params["b2"]), _row128(s2), _row128(h2s),
                      _row128(params["b3"]), _row128(s3), _row128(h3s)],
                     axis=0)                                           # (11, 128)

    # stride-2 selection matrix (row q = 8*oh + ow picks flat position
    # p = 32*oh + 2*ow), precomputed host-side (review item: no in-kernel iota).
    q = jnp.arange(64)
    want = (q // 8) * 32 + (q % 8) * 2
    sel = (jnp.arange(P)[None, :] == want[:, None]).astype(jnp.float32)  # (64, 256)

    # generation-aware grid: one step (M = N*256) on single-TC chips; two
    # "parallel" steps only when the chip really has two TensorCores (v7x/v4).
    G = 2 if (num_tc >= 2 and N % 2 == 0 and N >= 2) else 1
    NB = N // G

    def fixed(shape):
        return pl.BlockSpec(shape, lambda g, _s=shape: (0,) * len(_s))

    out = pl.pallas_call(
        _make_kernel(NB, use_roll, roll_sign),
        out_shape=jax.ShapeDtypeStruct((N * 64, 32), jnp.float32),
        grid=(G,),
        in_specs=[
            pl.BlockSpec((NB * P, 19), lambda g: (g, 0)),
            fixed((19, 64)),
            fixed((9, 64, 32)),
            fixed((9, 34, 32)),
            fixed((4, 32, 32)),
            fixed((11, 128)),
            fixed((64, P)),
        ],
        out_specs=pl.BlockSpec((NB * 64, 32), lambda g: (g, 0)),
        compiler_params=pltpu.CompilerParams(
            dimension_semantics=("parallel",)),
    )(x1, w1a, w1b, w2, w3, vecs, sel)

    # (N*64, 32) -> NCHW flatten (C, 8, 8) -> (B, S, 2048)
    y = out.reshape(N, 64, 32)
    y = jnp.transpose(y, (0, 2, 1)).reshape(B, S, 32 * 8 * 8)
    return y


# --------------------------- pure-JAX reference ----------------------------- #
def _conv_nchw(x, w, b, stride, pad):
    y = lax.conv_general_dilated(x, w, (stride, stride),
                                 [(pad, pad), (pad, pad)],
                                 dimension_numbers=("NCHW", "OIHW", "NCHW"))
    return y + b[None, :, None, None]


def _bn_nchw(x, bnp):
    g, b, mu, var = bnp
    return ((x - mu[None, :, None, None]) /
            jnp.sqrt(var[None, :, None, None] + BN_EPS) *
            g[None, :, None, None] + b[None, :, None, None])


def reference(r, d, m, t, p):
    B, S = t.shape
    rn = 2.0 * r / 255.0 - 1.0
    dn = 2.0 * d / 255.0 - 1.0
    mn = 2.0 * (m - jnp.min(m)) / (jnp.max(m) - jnp.min(m)) - 1.0
    tn = 2.0 * (t - jnp.min(t)) / (jnp.max(t) - jnp.min(t)) - 1.0
    im = jnp.concatenate([rn, dn], axis=2)
    outs = []
    for i in range(B):
        x = im[i]
        h = _bn_nchw(_leaky(_conv_nchw(x, p["w1a"], p["b1a"], 2, 0)), p["bn1a"])
        imim = _bn_nchw(_leaky(_conv_nchw(h, p["w1b"], p["b1b"], 1, 1)), p["bn1b"])
        tt = jnp.broadcast_to(tn[i][:, None, None, None], (S, 1, 16, 16))
        mm = jnp.broadcast_to(mn[i][:, None, None, :], (S, 1, 16, 16))
        mc = jnp.concatenate([imim, tt, mm], axis=1)
        h2 = _bn_nchw(_leaky(_conv_nchw(mc, p["w2"], p["b2"], 1, 1)), p["bn2"]) + imim
        h3 = _bn_nchw(_leaky(_conv_nchw(h2, p["w3"], p["b3"], 2, 0)), p["bn3"])
        outs.append(h3[None])
    return jnp.concatenate(outs, 0).reshape(B, S, -1)


# ----------------------------------- main ----------------------------------- #
if __name__ == "__main__":
    B, S = 2, 4        # batch_size=2, seq_len=4, n_features=32*8*8=2048
    key = jax.random.PRNGKey(0)
    kr, kd, km, kt, kp = jax.random.split(key, 5)
    r = jax.random.uniform(kr, (B, S, 3, 32, 32), jnp.float32, 0.0, 255.0)
    d = jax.random.uniform(kd, (B, S, 1, 32, 32), jnp.float32, 0.0, 255.0)
    m = jax.random.normal(km, (B, S, 16), jnp.float32)
    t = jax.random.normal(kt, (B, S), jnp.float32)
    params = init_params(kp)

    # Host-side feature detection (outside jit): roll convention / TC count.
    use_roll, roll_sign = probe_roll_support()
    num_tc = tensorcores_per_chip()

    fn = jax.jit(functools.partial(multisensory_fusion, use_roll=use_roll,
                                   roll_sign=roll_sign, num_tc=num_tc))
    out = jax.block_until_ready(fn(r, d, m, t, params))

    ref = reference(r, d, m, t, params)
    assert out.shape == (B, S, 2048), out.shape
    assert bool(jnp.allclose(out, ref, atol=1e-3, rtol=1e-3)), \
        float(jnp.max(jnp.abs(out - ref)))
    print("KERNEL_OK")
</pallas_src>

<mosaic_0001>
module attributes {stable_mosaic.version = 11 : i64} {
  func.func @k(%arg0: memref<8x128xf32, #tpu.memory_space<vmem>>, %arg1: memref<8x128xf32, #tpu.memory_space<vmem>>) attributes {dimension_semantics = [], scalar_prefetch = 0 : i64, scratch_operands = 0 : i64, tpu.core_type = #tpu.core_type<tc>} {
    %c0 = arith.constant 0 : index
    %c0_0 = arith.constant 0 : index
    %0 = vector.load %arg0[%c0, %c0_0] : memref<8x128xf32, #tpu.memory_space<vmem>>, vector<8x128xf32>
    %c1_i32 = arith.constant 1 : i32
    %1 = tpu.dynamic_rotate %0 by %c1_i32 dim 0 : vector<8x128xf32>, i32 -> vector<8x128xf32>
    %c0_1 = arith.constant 0 : index
    %c0_2 = arith.constant 0 : index
    %2 = vector.load %arg1[%c0_1, %c0_2] : memref<8x128xf32, #tpu.memory_space<vmem>>, vector<8x128xf32>
    tpu.vector_store %arg1[%c0_1, %c0_2], %1 {strides = array<i32>} : memref<8x128xf32, #tpu.memory_space<vmem>>, vector<8x128xf32>,
    return
  }
}

module attributes {stable_mosaic.version = 11 : i64} {
  func.func @kernel(%arg0: i32, %arg1: memref<2048x19xf32, #tpu.memory_space<vmem>>, %arg2: memref<19x64xf32, #tpu.memory_space<vmem>>, %arg3: memref<9x64x32xf32, #tpu.memory_space<vmem>>, %arg4: memref<9x34x32xf32, #tpu.memory_space<vmem>>, %arg5: memref<4x32x32xf32, #tpu.memory_space<vmem>>, %arg6: memref<11x128xf32, #tpu.memory_space<vmem>>, %arg7: memref<64x256xf32, #tpu.memory_space<vmem>>, %arg8: memref<512x32xf32, #tpu.memory_space<vmem>>) attributes {dimension_semantics = [#tpu.dimension_semantics<parallel>], iteration_bounds = array<i64: 1>, scalar_prefetch = 0 : i64, scratch_operands = 0 : i64, tpu.core_type = #tpu.core_type<tc>, window_params = [{transform_indices = @transform_0, window_bounds = array<i64: 2048, 19>}, {pipeline_mode = #tpu.pipeline_mode<synchronous>, transform_indices = @transform_1, window_bounds = array<i64: 19, 64>}, {pipeline_mode = #tpu.pipeline_mode<synchronous>, transform_indices = @transform_2, window_bounds = array<i64: 9, 64, 32>}, {pipeline_mode = #tpu.pipeline_mode<synchronous>, transform_indices = @transform_3, window_bounds = array<i64: 9, 34, 32>}, {pipeline_mode = #tpu.pipeline_mode<synchronous>, transform_indices = @transform_4, window_bounds = array<i64: 4, 32, 32>}, {pipeline_mode = #tpu.pipeline_mode<synchronous>, transform_indices = @transform_5, window_bounds = array<i64: 11, 128>}, {pipeline_mode = #tpu.pipeline_mode<synchronous>, transform_indices = @transform_6, window_bounds = array<i64: 64, 256>}, {transform_indices = @transform_7, window_bounds = array<i64: 512, 32>}]} {
    %c0 = arith.constant 0 : index
    %c0_0 = arith.constant 0 : index
    %0 = vector.load %arg1[%c0, %c0_0] : memref<2048x19xf32, #tpu.memory_space<vmem>>, vector<2048x19xf32>
    %c0_1 = arith.constant 0 : index
    %c0_2 = arith.constant 0 : index
    %1 = vector.load %arg2[%c0_1, %c0_2] : memref<19x64xf32, #tpu.memory_space<vmem>>, vector<19x64xf32>
    %cst = arith.constant dense<0.000000e+00> : vector<2048x64xf32>
    %2 = tpu.matmul %0, %1, %cst {dimension_numbers = #tpu.dot_dimension_numbers<[1], [0], [0], [1], [0, 0, 1, 1], [], []>} : vector<2048x19xf32>, vector<19x64xf32>, vector<2048x64xf32> -> vector<2048x64xf32>
    %cst_3 = arith.constant 0.000000e+00 : f32
    %3 = vector.broadcast %cst_3 : f32 to vector<2048x64xf32>
    %4 = arith.cmpf ogt, %2, %3 : vector<2048x64xf32>
    %cst_4 = arith.constant 0.00999999977 : f32
    %5 = vector.broadcast %cst_4 : f32 to vector<2048x64xf32>
    %6 = arith.mulf %5, %2 : vector<2048x64xf32>
    %7 = arith.select %4, %2, %6 : vector<2048x64xi1>, vector<2048x64xf32>
    %c0_5 = arith.constant 0 : index
    %c0_6 = arith.constant 0 : index
    %8 = vector.load %arg6[%c0_5, %c0_6] : memref<11x128xf32, #tpu.memory_space<vmem>>, vector<1x64xf32>
    %9 = vector.broadcast %8 : vector<1x64xf32> to vector<2048x64xf32>
    %10 = arith.mulf %7, %9 : vector<2048x64xf32>
    %c1 = arith.constant 1 : index
    %c0_7 = arith.constant 0 : index
    %11 = vector.load %arg6[%c1, %c0_7] : memref<11x128xf32, #tpu.memory_space<vmem>>, vector<1x64xf32>
    %12 = vector.broadcast %11 : vector<1x64xf32> to vector<2048x64xf32>
    %13 = arith.addf %10, %12 : vector<2048x64xf32>
    %14 = tpu.iota {dimensions = array<i32: 0>} : vector<2048x1xi32>
    %c255_i32 = arith.constant 255 : i32
    %15 = vector.broadcast %c255_i32 : i32 to vector<2048x1xi32>
    %16 = arith.andi %14, %15 : vector<2048x1xi32>
    %c4_i32 = arith.constant 4 : i32
    %17 = vector.broadcast %c4_i32 : i32 to vector<2048x1xi32>
    %18 = arith.shrsi %16, %17 : vector<2048x1xi32>
    %c15_i32 = arith.constant 15 : i32
    %19 = vector.broadcast %c15_i32 : i32 to vector<2048x1xi32>
    %20 = arith.andi %16, %19 : vector<2048x1xi32>
    %c-1_i32 = arith.constant -1 : i32
    %21 = vector.broadcast %c-1_i32 : i32 to vector<2048x1xi32>
    %22 = arith.addi %18, %21 : vector<2048x1xi32>
    %c0_i32 = arith.constant 0 : i32
    %23 = vector.broadcast %c0_i32 : i32 to vector<2048x1xi32>
    %24 = arith.cmpi sge, %22, %23 : vector<2048x1xi32>
    %c-1_i32_8 = arith.constant -1 : i32
    %25 = vector.broadcast %c-1_i32_8 : i32 to vector<2048x1xi32>
    %26 = arith.addi %18, %25 : vector<2048x1xi32>
    %c16_i32 = arith.constant 16 : i32
    %27 = vector.broadcast %c16_i32 : i32 to vector<2048x1xi32>
    %28 = arith.cmpi slt, %26, %27 : vector<2048x1xi32>
    %29 = arith.andi %24, %28 : vector<2048x1xi1>
    %c-1_i32_9 = arith.constant -1 : i32
    %30 = vector.broadcast %c-1_i32_9 : i32 to vector<2048x1xi32>
    %31 = arith.addi %20, %30 : vector<2048x1xi32>
    %c0_i32_10 = arith.constant 0 : i32
    %32 = vector.broadcast %c0_i32_10 : i32 to vector<2048x1xi32>
    %33 = arith.cmpi sge, %31, %32 : vector<2048x1xi32>
    %34 = arith.andi %29, %33 : vector<2048x1xi1>
    %c-1_i32_11 = arith.constant -1 : i32
    %35 = vector.broadcast %c-1_i32_11 : i32 to vector<2048x1xi32>
    %36 = arith.addi %20, %35 : vector<2048x1xi32>
    %c16_i32_12 = arith.constant 16 : i32
    %37 = vector.broadcast %c16_i32_12 : i32 to vector<2048x1xi32>
    %38 = arith.cmpi slt, %36, %37 : vector<2048x1xi32>
    %39 = arith.andi %34, %38 : vector<2048x1xi1>
    %c-1_i32_13 = arith.constant -1 : i32
    %40 = vector.broadcast %c-1_i32_13 : i32 to vector<2048x1xi32>
    %41 = arith.addi %18, %40 : vector<2048x1xi32>
    %c0_i32_14 = arith.constant 0 : i32
    %42 = vector.broadcast %c0_i32_14 : i32 to vector<2048x1xi32>
    %43 = arith.cmpi sge, %41, %42 : vector<2048x1xi32>
    %c-1_i32_15 = arith.constant -1 : i32
    %44 = vector.broadcast %c-1_i32_15 : i32 to vector<2048x1xi32>
    %45 = arith.addi %18, %44 : vector<2048x1xi32>
    %c16_i32_16 = arith.constant 16 : i32
    %46 = vector.broadcast %c16_i32_16 : i32 to vector<2048x1xi32>
    %47 = arith.cmpi slt, %45, %46 : vector<2048x1xi32>
    %48 = arith.andi %43, %47 : vector<2048x1xi1>
    %c0_i32_17 = arith.constant 0 : i32
    %49 = vector.broadcast %c0_i32_17 : i32 to vector<2048x1xi32>
    %50 = arith.addi %20, %49 : vector<2048x1xi32>
    %c0_i32_18 = arith.constant 0 : i32
    %51 = vector.broadcast %c0_i32_18 : i32 to vector<2048x1xi32>
    %52 = arith.cmpi sge, %50, %51 : vector<2048x1xi32>
    %53 = arith.andi %48, %52 : vector<2048x1xi1>
    %c0_i32_19 = arith.constant 0 : i32
    %54 = vector.broadcast %c0_i32_19 : i32 to vector<2048x1xi32>
    %55 = arith.addi %20, %54 : vector<2048x1xi32>
    %c16_i32_20 = arith.constant 16 : i32
    %56 = vector.broadcast %c16_i32_20 : i32 to vector<2048x1xi32>
    %57 = arith.cmpi slt, %55, %56 : vector<2048x1xi32>
    %58 = arith.andi %53, %57 : vector<2048x1xi1>
    %c-1_i32_21 = arith.constant -1 : i32
    %59 = vector.broadcast %c-1_i32_21 : i32 to vector<2048x1xi32>
    %60 = arith.addi %18, %59 : vector<2048x1xi32>
    %c0_i32_22 = arith.constant 0 : i32
    %61 = vector.broadcast %c0_i32_22 : i32 to vector<2048x1xi32>
    %62 = arith.cmpi sge, %60, %61 : vector<2048x1xi32>
    %c-1_i32_23 = arith.constant -1 : i32
    %63 = vector.broadcast %c-1_i32_23 : i32 to vector<2048x1xi32>
    %64 = arith.addi %18, %63 : vector<2048x1xi32>
    %c16_i32_24 = arith.constant 16 : i32
    %65 = vector.broadcast %c16_i32_24 : i32 to vector<2048x1xi32>
    %66 = arith.cmpi slt, %64, %65 : vector<2048x1xi32>
    %67 = arith.andi %62, %66 : vector<2048x1xi1>
    %c1_i32 = arith.constant 1 : i32
    %68 = vector.broadcast %c1_i32 : i32 to vector<2048x1xi32>
    %69 = arith.addi %20, %68 : vector<2048x1xi32>
    %c0_i32_25 = arith.constant 0 : i32
    %70 = vector.broadcast %c0_i32_25 : i32 to vector<2048x1xi32>
    %71 = arith.cmpi sge, %69, %70 : vector<2048x1xi32>
    %72 = arith.andi %67, %71 : vector<2048x1xi1>
    %c1_i32_26 = arith.constant 1 : i32
    %73 = vector.broadcast %c1_i32_26 : i32 to vector<2048x1xi32>
    %74 = arith.addi %20, %73 : vector<2048x1xi32>
    %c16_i32_27 = arith.constant 16 : i32
    %75 = vector.broadcast %c16_i32_27 : i32 to vector<2048x1xi32>
    %76 = arith.cmpi slt, %74, %75 : vector<2048x1xi32>
    %77 = arith.andi %72, %76 : vector<2048x1xi1>
    %c0_i32_28 = arith.constant 0 : i32
    %78 = vector.broadcast %c0_i32_28 : i32 to vector<2048x1xi32>
    %79 = arith.addi %18, %78 : vector<2048x1xi32>
    %c0_i32_29 = arith.constant 0 : i32
    %80 = vector.broadcast %c0_i32_29 : i32 to vector<2048x1xi32>
    %81 = arith.cmpi sge, %79, %80 : vector<2048x1xi32>
    %c0_i32_30 = arith.constant 0 : i32
    %82 = vector.broadcast %c0_i32_30 : i32 to vector<2048x1xi32>
    %83 = arith.addi %18, %82 : vector<2048x1xi32>
    %c16_i32_31 = arith.constant 16 : i32
    %84 = vector.broadcast %c16_i32_31 : i32 to vector<2048x1xi32>
    %85 = arith.cmpi slt, %83, %84 : vector<2048x1xi32>
    %86 = arith.andi %81, %85 : vector<2048x1xi1>
    %c-1_i32_32 = arith.constant -1 : i32
    %87 = vector.broadcast %c-1_i32_32 : i32 to vector<2048x1xi32>
    %88 = arith.addi %20, %87 : vector<2048x1xi32>
    %c0_i32_33 = arith.constant 0 : i32
    %89 = vector.broadcast %c0_i32_33 : i32 to vector<2048x1xi32>
    %90 = arith.cmpi sge, %88, %89 : vector<2048x1xi32>
    %91 = arith.andi %86, %90 : vector<2048x1xi1>
    %c-1_i32_34 = arith.constant -1 : i32
    %92 = vector.broadcast %c-1_i32_34 : i32 to vector<2048x1xi32>
    %93 = arith.addi %20, %92 : vector<2048x1xi32>
    %c16_i32_35 = arith.constant 16 : i32
    %94 = vector.broadcast %c16_i32_35 : i32 to vector<2048x1xi32>
    %95 = arith.cmpi slt, %93, %94 : vector<2048x1xi32>
    %96 = arith.andi %91, %95 : vector<2048x1xi1>
    %c0_i32_36 = arith.constant 0 : i32
    %97 = vector.broadcast %c0_i32_36 : i32 to vector<2048x1xi32>
    %98 = arith.addi %18, %97 : vector<2048x1xi32>
    %c0_i32_37 = arith.constant 0 : i32
    %99 = vector.broadcast %c0_i32_37 : i32 to vector<2048x1xi32>
    %100 = arith.cmpi sge, %98, %99 : vector<2048x1xi32>
    %c0_i32_38 = arith.constant 0 : i32
    %101 = vector.broadcast %c0_i32_38 : i32 to vector<2048x1xi32>
    %102 = arith.addi %18, %101 : vector<2048x1xi32>
    %c16_i32_39 = arith.constant 16 : i32
    %103 = vector.broadcast %c16_i32_39 : i32 to vector<2048x1xi32>
    %104 = arith.cmpi slt, %102, %103 : vector<2048x1xi32>
    %105 = arith.andi %100, %104 : vector<2048x1xi1>
    %c0_i32_40 = arith.constant 0 : i32
    %106 = vector.broadcast %c0_i32_40 : i32 to vector<2048x1xi32>
    %107 = arith.addi %20, %106 : vector<2048x1xi32>
    %c0_i32_41 = arith.constant 0 : i32
    %108 = vector.broadcast %c0_i32_41 : i32 to vector<2048x1xi32>
    %109 = arith.cmpi sge, %107, %108 : vector<2048x1xi32>
    %110 = arith.andi %105, %109 : vector<2048x1xi1>
    %c0_i32_42 = arith.constant 0 : i32
    %111 = vector.broadcast %c0_i32_42 : i32 to vector<2048x1xi32>
    %112 = arith.addi %20, %111 : vector<2048x1xi32>
    %c16_i32_43 = arith.constant 16 : i32
    %113 = vector.broadcast %c16_i32_43 : i32 to vector<2048x1xi32>
    %114 = arith.cmpi slt, %112, %113 : vector<2048x1xi32>
    %115 = arith.andi %110, %114 : vector<2048x1xi1>
    %c0_i32_44 = arith.constant 0 : i32
    %116 = vector.broadcast %c0_i32_44 : i32 to vector<2048x1xi32>
    %117 = arith.addi %18, %116 : vector<2048x1xi32>
    %c0_i32_45 = arith.constant 0 : i32
    %118 = vector.broadcast %c0_i32_45 : i32 to vector<2048x1xi32>
    %119 = arith.cmpi sge, %117, %118 : vector<2048x1xi32>
    %c0_i32_46 = arith.constant 0 : i32
    %120 = vector.broadcast %c0_i32_46 : i32 to vector<2048x1xi32>
    %121 = arith.addi %18, %120 : vector<2048x1xi32>
    %c16_i32_47 = arith.constant 16 : i32
    %122 = vector.broadcast %c16_i32_47 : i32 to vector<2048x1xi32>
    %123 = arith.cmpi slt, %121, %122 : vector<2048x1xi32>
    %124 = arith.andi %119, %123 : vector<2048x1xi1>
    %c1_i32_48 = arith.constant 1 : i32
    %125 = vector.broadcast %c1_i32_48 : i32 to vector<2048x1xi32>
    %126 = arith.addi %20, %125 : vector<2048x1xi32>
    %c0_i32_49 = arith.constant 0 : i32
    %127 = vector.broadcast %c0_i32_49 : i32 to vector<2048x1xi32>
    %128 = arith.cmpi sge, %126, %127 : vector<2048x1xi32>
    %129 = arith.andi %124, %128 : vector<2048x1xi1>
    %c1_i32_50 = arith.constant 1 : i32
    %130 = vector.broadcast %c1_i32_50 : i32 to vector<2048x1xi32>
    %131 = arith.addi %20, %130 : vector<2048x1xi32>
    %c16_i32_51 = arith.constant 16 : i32
    %132 = vector.broadcast %c16_i32_51 : i32 to vector<2048x1xi32>
    %133 = arith.cmpi slt, %131, %132 : vector<2048x1xi32>
    %134 = arith.andi %129, %133 : vector<2048x1xi1>
    %c1_i32_52 = arith.constant 1 : i32
    %135 = vector.broadcast %c1_i32_52 : i32 to vector<2048x1xi32>
    %136 = arith.addi %18, %135 : vector<2048x1xi32>
    %c0_i32_53 = arith.constant 0 : i32
    %137 = vector.broadcast %c0_i32_53 : i32 to vector<2048x1xi32>
    %138 = arith.cmpi sge, %136, %137 : vector<2048x1xi32>
    %c1_i32_54 = arith.constant 1 : i32
    %139 = vector.broadcast %c1_i32_54 : i32 to vector<2048x1xi32>
    %140 = arith.addi %18, %139 : vector<2048x1xi32>
    %c16_i32_55 = arith.constant 16 : i32
    %141 = vector.broadcast %c16_i32_55 : i32 to vector<2048x1xi32>
    %142 = arith.cmpi slt, %140, %141 : vector<2048x1xi32>
    %143 = arith.andi %138, %142 : vector<2048x1xi1>
    %c-1_i32_56 = arith.constant -1 : i32
    %144 = vector.broadcast %c-1_i32_56 : i32 to vector<2048x1xi32>
    %145 = arith.addi %20, %144 : vector<2048x1xi32>
    %c0_i32_57 = arith.constant 0 : i32
    %146 = vector.broadcast %c0_i32_57 : i32 to vector<2048x1xi32>
    %147 = arith.cmpi sge, %145, %146 : vector<2048x1xi32>
    %148 = arith.andi %143, %147 : vector<2048x1xi1>
    %c-1_i32_58 = arith.constant -1 : i32
    %149 = vector.broadcast %c-1_i32_58 : i32 to vector<2048x1xi32>
    %150 = arith.addi %20, %149 : vector<2048x1xi32>
    %c16_i32_59 = arith.constant 16 : i32
    %151 = vector.broadcast %c16_i32_59 : i32 to vector<2048x1xi32>
    %152 = arith.cmpi slt, %150, %151 : vector<2048x1xi32>
    %153 = arith.andi %148, %152 : vector<2048x1xi1>
    %c1_i32_60 = arith.constant 1 : i32
    %154 = vector.broadcast %c1_i32_60 : i32 to vector<2048x1xi32>
    %155 = arith.addi %18, %154 : vector<2048x1xi32>
    %c0_i32_61 = arith.constant 0 : i32
    %156 = vector.broadcast %c0_i32_61 : i32 to vector<2048x1xi32>
    %157 = arith.cmpi sge, %155, %156 : vector<2048x1xi32>
    %c1_i32_62 = arith.constant 1 : i32
    %158 = vector.broadcast %c1_i32_62 : i32 to vector<2048x1xi32>
    %159 = arith.addi %18, %158 : vector<2048x1xi32>
    %c16_i32_63 = arith.constant 16 : i32
    %160 = vector.broadcast %c16_i32_63 : i32 to vector<2048x1xi32>
    %161 = arith.cmpi slt, %159, %160 : vector<2048x1xi32>
    %162 = arith.andi %157, %161 : vector<2048x1xi1>
    %c0_i32_64 = arith.constant 0 : i32
    %163 = vector.broadcast %c0_i32_64 : i32 to vector<2048x1xi32>
    %164 = arith.addi %20, %163 : vector<2048x1xi32>
    %c0_i32_65 = arith.constant 0 : i32
    %165 = vector.broadcast %c0_i32_65 : i32 to vector<2048x1xi32>
    %166 = arith.cmpi sge, %164, %165 : vector<2048x1xi32>
    %167 = arith.andi %162, %166 : vector<2048x1xi1>
    %c0_i32_66 = arith.constant 0 : i32
    %168 = vector.broadcast %c0_i32_66 : i32 to vector<2048x1xi32>
    %169 = arith.addi %20, %168 : vector<2048x1xi32>
    %c16_i32_67 = arith.constant 16 : i32
    %170 = vector.broadcast %c16_i32_67 : i32 to vector<2048x1xi32>
    %171 = arith.cmpi slt, %169, %170 : vector<2048x1xi32>
    %172 = arith.andi %167, %171 : vector<2048x1xi1>
    %c1_i32_68 = arith.constant 1 : i32
    %173 = vector.broadcast %c1_i32_68 : i32 to vector<2048x1xi32>
    %174 = arith.addi %18, %173 : vector<2048x1xi32>
    %c0_i32_69 = arith.constant 0 : i32
    %175 = vector.broadcast %c0_i32_69 : i32 to vector<2048x1xi32>
    %176 = arith.cmpi sge, %174, %175 : vector<2048x1xi32>
    %c1_i32_70 = arith.constant 1 : i32
    %177 = vector.broadcast %c1_i32_70 : i32 to vector<2048x1xi32>
    %178 = arith.addi %18, %177 : vector<2048x1xi32>
    %c16_i32_71 = arith.constant 16 : i32
    %179 = vector.broadcast %c16_i32_71 : i32 to vector<2048x1xi32>
    %180 = arith.cmpi slt, %178, %179 : vector<2048x1xi32>
    %181 = arith.andi %176, %180 : vector<2048x1xi1>
    %c1_i32_72 = arith.constant 1 : i32
    %182 = vector.broadcast %c1_i32_72 : i32 to vector<2048x1xi32>
    %183 = arith.addi %20, %182 : vector<2048x1xi32>
    %c0_i32_73 = arith.constant 0 : i32
    %184 = vector.broadcast %c0_i32_73 : i32 to vector<2048x1xi32>
    %185 = arith.cmpi sge, %183, %184 : vector<2048x1xi32>
    %186 = arith.andi %181, %185 : vector<2048x1xi1>
    %c1_i32_74 = arith.constant 1 : i32
    %187 = vector.broadcast %c1_i32_74 : i32 to vector<2048x1xi32>
    %188 = arith.addi %20, %187 : vector<2048x1xi32>
    %c16_i32_75 = arith.constant 16 : i32
    %189 = vector.broadcast %c16_i32_75 : i32 to vector<2048x1xi32>
    %190 = arith.cmpi slt, %188, %189 : vector<2048x1xi32>
    %191 = arith.andi %186, %190 : vector<2048x1xi1>
    %c2 = arith.constant 2 : index
    %c0_76 = arith.constant 0 : index
    %192 = vector.load %arg6[%c2, %c0_76] : memref<11x128xf32, #tpu.memory_space<vmem>>, vector<1x32xf32>
    %cst_77 = arith.constant 0.000000e+00 : f32
    %193 = vector.broadcast %cst_77 : f32 to vector<2048x32xf32>
    %194 = vector.broadcast %192 : vector<1x32xf32> to vector<2048x32xf32>
    %195 = arith.addf %193, %194 : vector<2048x32xf32>
    %c0_78 = arith.constant 0 : index
    %c0_79 = arith.constant 0 : index
    %c0_80 = arith.constant 0 : index
    %196 = vector.load %arg3[%c0_78, %c0_79, %c0_80] : memref<9x64x32xf32, #tpu.memory_space<vmem>>, vector<1x64x32xf32>
    %197 = vector.shape_cast %196 : vector<1x64x32xf32> to vector<64x32xf32>
    %cst_81 = arith.constant dense<0.000000e+00> : vector<2048x32xf32>
    %198 = tpu.matmul %13, %197, %cst_81 {dimension_numbers = #tpu.dot_dimension_numbers<[1], [0], [0], [1], [0, 0, 1, 1], [], []>} : vector<2048x64xf32>, vector<64x32xf32>, vector<2048x32xf32> -> vector<2048x32xf32>
    %cst_82 = arith.constant 0.000000e+00 : f32
    %199 = vector.broadcast %cst_82 : f32 to vector<24x32xf32>
    %200 = tpu.concatenate %199, %198, %199 in 0 : vector<24x32xf32>, vector<2048x32xf32>, vector<24x32xf32> -> vector<2096x32xf32>
    %201 = vector.extract_strided_slice %200 {offsets = [7, 0], sizes = [2048, 32], strides = [1, 1]} : vector<2096x32xf32> to vector<2048x32xf32>
    %cst_83 = arith.constant 0.000000e+00 : f32
    %202 = vector.shape_cast %39 : vector<2048x1xi1> to vector<2048x1xi1>
    %203 = vector.broadcast %202 : vector<2048x1xi1> to vector<2048x32xi1>
    %204 = vector.broadcast %cst_83 : f32 to vector<2048x32xf32>
    %205 = arith.select %203, %201, %204 : vector<2048x32xi1>, vector<2048x32xf32>
    %206 = arith.addf %195, %205 : vector<2048x32xf32>
    %c1_84 = arith.constant 1 : index
    %c0_85 = arith.constant 0 : index
    %c0_86 = arith.constant 0 : index
    %207 = vector.load %arg3[%c1_84, %c0_85, %c0_86] : memref<9x64x32xf32, #tpu.memory_space<vmem>>, vector<1x64x32xf32>
    %208 = vector.shape_cast %207 : vector<1x64x32xf32> to vector<64x32xf32>
    %cst_87 = arith.constant dense<0.000000e+00> : vector<2048x32xf32>
    %209 = tpu.matmul %13, %208, %cst_87 {dimension_numbers = #tpu.dot_dimension_numbers<[1], [0], [0], [1], [0, 0, 1, 1], [], []>} : vector<2048x64xf32>, vector<64x32xf32>, vector<2048x32xf32> -> vector<2048x32xf32>
    %cst_88 = arith.constant 0.000000e+00 : f32
    %210 = vector.broadcast %cst_88 : f32 to vector<24x32xf32>
    %211 = tpu.concatenate %210, %209, %210 in 0 : vector<24x32xf32>, vector<2048x32xf32>, vector<24x32xf32> -> vector<2096x32xf32>
    %212 = vector.extract_strided_slice %211 {offsets = [8, 0], sizes = [2048, 32], strides = [1, 1]} : vector<2096x32xf32> to vector<2048x32xf32>
    %cst_89 = arith.constant 0.000000e+00 : f32
    %213 = vector.shape_cast %58 : vector<2048x1xi1> to vector<2048x1xi1>
    %214 = vector.broadcast %213 : vector<2048x1xi1> to vector<2048x32xi1>
    %215 = vector.broadcast %cst_89 : f32 to vector<2048x32xf32>
    %216 = arith.select %214, %212, %215 : vector<2048x32xi1>, vector<2048x32xf32>
    %217 = arith.addf %206, %216 : vector<2048x32xf32>
    %c2_90 = arith.constant 2 : index
    %c0_91 = arith.constant 0 : index
    %c0_92 = arith.constant 0 : index
    %218 = vector.load %arg3[%c2_90, %c0_91, %c0_92] : memref<9x64x32xf32, #tpu.memory_space<vmem>>, vector<1x64x32xf32>
    %219 = vector.shape_cast %218 : vector<1x64x32xf32> to vector<64x32xf32>
    %cst_93 = arith.constant dense<0.000000e+00> : vector<2048x32xf32>
    %220 = tpu.matmul %13, %219, %cst_93 {dimension_numbers = #tpu.dot_dimension_numbers<[1], [0], [0], [1], [0, 0, 1, 1], [], []>} : vector<2048x64xf32>, vector<64x32xf32>, vector<2048x32xf32> -> vector<2048x32xf32>
    %cst_94 = arith.constant 0.000000e+00 : f32
    %221 = vector.broadcast %cst_94 : f32 to vector<24x32xf32>
    %222 = tpu.concatenate %221, %220, %221 in 0 : vector<24x32xf32>, vector<2048x32xf32>, vector<24x32xf32> -> vector<2096x32xf32>
    %223 = vector.extract_strided_slice %222 {offsets = [9, 0], sizes = [2048, 32], strides = [1, 1]} : vector<2096x32xf32> to vector<2048x32xf32>
    %cst_95 = arith.constant 0.000000e+00 : f32
    %224 = vector.shape_cast %77 : vector<2048x1xi1> to vector<2048x1xi1>
    %225 = vector.broadcast %224 : vector<2048x1xi1> to vector<2048x32xi1>
    %226 = vector.broadcast %cst_95 : f32 to vector<2048x32xf32>
    %227 = arith.select %225, %223, %226 : vector<2048x32xi1>, vector<2048x32xf32>
    %228 = arith.addf %217, %227 : vector<2048x32xf32>
    %c3 = arith.constant 3 : index
    %c0_96 = arith.constant 0 : index
    %c0_97 = arith.constant 0 : index
    %229 = vector.load %arg3[%c3, %c0_96, %c0_97] : memref<9x64x32xf32, #tpu.memory_space<vmem>>, vector<1x64x32xf32>
    %230 = vector.shape_cast %229 : vector<1x64x32xf32> to vector<64x32xf32>
    %cst_98 = arith.constant dense<0.000000e+00> : vector<2048x32xf32>
    %231 = tpu.matmul %13, %230, %cst_98 {dimension_numbers = #tpu.dot_dimension_numbers<[1], [0], [0], [1], [0, 0, 1, 1], [], []>} : vector<2048x64xf32>, vector<64x32xf32>, vector<2048x32xf32> -> vector<2048x32xf32>
    %cst_99 = arith.constant 0.000000e+00 : f32
    %232 = vector.broadcast %cst_99 : f32 to vector<24x32xf32>
    %233 = tpu.concatenate %232, %231, %232 in 0 : vector<24x32xf32>, vector<2048x32xf32>, vector<24x32xf32> -> vector<2096x32xf32>
    %234 = vector.extract_strided_slice %233 {offsets = [23, 0], sizes = [2048, 32], strides = [1, 1]} : vector<2096x32xf32> to vector<2048x32xf32>
    %cst_100 = arith.constant 0.000000e+00 : f32
    %235 = vector.shape_cast %96 : vector<2048x1xi1> to vector<2048x1xi1>
    %236 = vector.broadcast %235 : vector<2048x1xi1> to vector<2048x32xi1>
    %237 = vector.broadcast %cst_100 : f32 to vector<2048x32xf32>
    %238 = arith.select %236, %234, %237 : vector<2048x32xi1>, vector<2048x32xf32>
    %239 = arith.addf %228, %238 : vector<2048x32xf32>
    %c4 = arith.constant 4 : index
    %c0_101 = arith.constant 0 : index
    %c0_102 = arith.constant 0 : index
    %240 = vector.load %arg3[%c4, %c0_101, %c0_102] : memref<9x64x32xf32, #tpu.memory_space<vmem>>, vector<1x64x32xf32>
    %241 = vector.shape_cast %240 : vector<1x64x32xf32> to vector<64x32xf32>
    %cst_103 = arith.constant dense<0.000000e+00> : vector<2048x32xf32>
    %242 = tpu.matmul %13, %241, %cst_103 {dimension_numbers = #tpu.dot_dimension_numbers<[1], [0], [0], [1], [0, 0, 1, 1], [], []>} : vector<2048x64xf32>, vector<64x32xf32>, vector<2048x32xf32> -> vector<2048x32xf32>
    %cst_104 = arith.constant 0.000000e+00 : f32
    %243 = vector.shape_cast %115 : vector<2048x1xi1> to vector<2048x1xi1>
    %244 = vector.broadcast %243 : vector<2048x1xi1> to vector<2048x32xi1>
    %245 = vector.broadcast %cst_104 : f32 to vector<2048x32xf32>
    %246 = arith.select %244, %242, %245 : vector<2048x32xi1>, vector<2048x32xf32>
    %247 = arith.addf %239, %246 : vector<2048x32xf32>
    %c5 = arith.constant 5 : index
    %c0_105 = arith.constant 0 : index
    %c0_106 = arith.constant 0 : index
    %248 = vector.load %arg3[%c5, %c0_105, %c0_106] : memref<9x64x32xf32, #tpu.memory_space<vmem>>, vector<1x64x32xf32>
    %249 = vector.shape_cast %248 : vector<1x64x32xf32> to vector<64x32xf32>
    %cst_107 = arith.constant dense<0.000000e+00> : vector<2048x32xf32>
    %250 = tpu.matmul %13, %249, %cst_107 {dimension_numbers = #tpu.dot_dimension_numbers<[1], [0], [0], [1], [0, 0, 1, 1], [], []>} : vector<2048x64xf32>, vector<64x32xf32>, vector<2048x32xf32> -> vector<2048x32xf32>
    %cst_108 = arith.constant 0.000000e+00 : f32
    %251 = vector.broadcast %cst_108 : f32 to vector<24x32xf32>
    %252 = tpu.concatenate %251, %250, %251 in 0 : vector<24x32xf32>, vector<2048x32xf32>, vector<24x32xf32> -> vector<2096x32xf32>
    %253 = vector.extract_strided_slice %252 {offsets = [25, 0], sizes = [2048, 32], strides = [1, 1]} : vector<2096x32xf32> to vector<2048x32xf32>
    %cst_109 = arith.constant 0.000000e+00 : f32
    %254 = vector.shape_cast %134 : vector<2048x1xi1> to vector<2048x1xi1>
    %255 = vector.broadcast %254 : vector<2048x1xi1> to vector<2048x32xi1>
    %256 = vector.broadcast %cst_109 : f32 to vector<2048x32xf32>
    %257 = arith.select %255, %253, %256 : vector<2048x32xi1>, vector<2048x32xf32>
    %258 = arith.addf %247, %257 : vector<2048x32xf32>
    %c6 = arith.constant 6 : index
    %c0_110 = arith.constant 0 : index
    %c0_111 = arith.constant 0 : index
    %259 = vector.load %arg3[%c6, %c0_110, %c0_111] : memref<9x64x32xf32, #tpu.memory_space<vmem>>, vector<1x64x32xf32>
    %260 = vector.shape_cast %259 : vector<1x64x32xf32> to vector<64x32xf32>
    %cst_112 = arith.constant dense<0.000000e+00> : vector<2048x32xf32>
    %261 = tpu.matmul %13, %260, %cst_112 {dimension_numbers = #tpu.dot_dimension_numbers<[1], [0], [0], [1], [0, 0, 1, 1], [], []>} : vector<2048x64xf32>, vector<64x32xf32>, vector<2048x32xf32> -> vector<2048x32xf32>
    %cst_113 = arith.constant 0.000000e+00 : f32
    %262 = vector.broadcast %cst_113 : f32 to vector<24x32xf32>
    %263 = tpu.concatenate %262, %261, %262 in 0 : vector<24x32xf32>, vector<2048x32xf32>, vector<24x32xf32> -> vector<2096x32xf32>
    %264 = vector.extract_strided_slice %263 {offsets = [39, 0], sizes = [2048, 32], strides = [1, 1]} : vector<2096x32xf32> to vector<2048x32xf32>
    %cst_114 = arith.constant 0.000000e+00 : f32
    %265 = vector.shape_cast %153 : vector<2048x1xi1> to vector<2048x1xi1>
    %266 = vector.broadcast %265 : vector<2048x1xi1> to vector<2048x32xi1>
    %267 = vector.broadcast %cst_114 : f32 to vector<2048x32xf32>
    %268 = arith.select %266, %264, %267 : vector<2048x32xi1>, vector<2048x32xf32>
    %269 = arith.addf %258, %268 : vector<2048x32xf32>
    %c7 = arith.constant 7 : index
    %c0_115 = arith.constant 0 : index
    %c0_116 = arith.constant 0 : index
    %270 = vector.load %arg3[%c7, %c0_115, %c0_116] : memref<9x64x32xf32, #tpu.memory_space<vmem>>, vector<1x64x32xf32>
    %271 = vector.shape_cast %270 : vector<1x64x32xf32> to vector<64x32xf32>
    %cst_117 = arith.constant dense<0.000000e+00> : vector<2048x32xf32>
    %272 = tpu.matmul %13, %271, %cst_117 {dimension_numbers = #tpu.dot_dimension_numbers<[1], [0], [0], [1], [0, 0, 1, 1], [], []>} : vector<2048x64xf32>, vector<64x32xf32>, vector<2048x32xf32> -> vector<2048x32xf32>
    %cst_118 = arith.constant 0.000000e+00 : f32
    %273 = vector.broadcast %cst_118 : f32 to vector<24x32xf32>
    %274 = tpu.concatenate %273, %272, %273 in 0 : vector<24x32xf32>, vector<2048x32xf32>, vector<24x32xf32> -> vector<2096x32xf32>
    %275 = vector.extract_strided_slice %274 {offsets = [40, 0], sizes = [2048, 32], strides = [1, 1]} : vector<2096x32xf32> to vector<2048x32xf32>
    %cst_119 = arith.constant 0.000000e+00 : f32
    %276 = vector.shape_cast %172 : vector<2048x1xi1> to vector<2048x1xi1>
    %277 = vector.broadcast %276 : vector<2048x1xi1> to vector<2048x32xi1>
    %278 = vector.broadcast %cst_119 : f32 to vector<2048x32xf32>
    %279 = arith.select %277, %275, %278 : vector<2048x32xi1>, vector<2048x32xf32>
    %280 = arith.addf %269, %279 : vector<2048x32xf32>
    %c8 = arith.constant 8 : index
    %c0_120 = arith.constant 0 : index
    %c0_121 = arith.constant 0 : index
    %281 = vector.load %arg3[%c8, %c0_120, %c0_121] : memref<9x64x32xf32, #tpu.memory_space<vmem>>, vector<1x64x32xf32>
    %282 = vector.shape_cast %281 : vector<1x64x32xf32> to vector<64x32xf32>
    %cst_122 = arith.constant dense<0.000000e+00> : vector<2048x32xf32>
    %283 = tpu.matmul %13, %282, %cst_122 {dimension_numbers = #tpu.dot_dimension_numbers<[1], [0], [0], [1], [0, 0, 1, 1], [], []>} : vector<2048x64xf32>, vector<64x32xf32>, vector<2048x32xf32> -> vector<2048x32xf32>
    %cst_123 = arith.constant 0.000000e+00 : f32
    %284 = vector.broadcast %cst_123 : f32 to vector<24x32xf32>
    %285 = tpu.concatenate %284, %283, %284 in 0 : vector<24x32xf32>, vector<2048x32xf32>, vector<24x32xf32> -> vector<2096x32xf32>
    %286 = vector.extract_strided_slice %285 {offsets = [41, 0], sizes = [2048, 32], strides = [1, 1]} : vector<2096x32xf32> to vector<2048x32xf32>
    %cst_124 = arith.constant 0.000000e+00 : f32
    %287 = vector.shape_cast %191 : vector<2048x1xi1> to vector<2048x1xi1>
    %288 = vector.broadcast %287 : vector<2048x1xi1> to vector<2048x32xi1>
    %289 = vector.broadcast %cst_124 : f32 to vector<2048x32xf32>
    %290 = arith.select %288, %286, %289 : vector<2048x32xi1>, vector<2048x32xf32>
    %291 = arith.addf %280, %290 : vector<2048x32xf32>
    %cst_125 = arith.constant 0.000000e+00 : f32
    %292 = vector.broadcast %cst_125 : f32 to vector<2048x32xf32>
    %293 = arith.cmpf ogt, %291, %292 : vector<2048x32xf32>
    %cst_126 = arith.constant 0.00999999977 : f32
    %294 = vector.broadcast %cst_126 : f32 to vector<2048x32xf32>
    %295 = arith.mulf %294, %291 : vector<2048x32xf32>
    %296 = arith.select %293, %291, %295 : vector<2048x32xi1>, vector<2048x32xf32>
    %c3_127 = arith.constant 3 : index
    %c0_128 = arith.constant 0 : index
    %297 = vector.load %arg6[%c3_127, %c0_128] : memref<11x128xf32, #tpu.memory_space<vmem>>, vector<1x32xf32>
    %298 = vector.broadcast %297 : vector<1x32xf32> to vector<2048x32xf32>
    %299 = arith.mulf %296, %298 : vector<2048x32xf32>
    %c4_129 = arith.constant 4 : index
    %c0_130 = arith.constant 0 : index
    %300 = vector.load %arg6[%c4_129, %c0_130] : memref<11x128xf32, #tpu.memory_space<vmem>>, vector<1x32xf32>
    %301 = vector.broadcast %300 : vector<1x32xf32> to vector<2048x32xf32>
    %302 = arith.addf %299, %301 : vector<2048x32xf32>
    %303 = vector.extract_strided_slice %0 {offsets = [0, 17], sizes = [2048, 2], strides = [1, 1]} : vector<2048x19xf32> to vector<2048x2xf32>
    %304 = tpu.concatenate %302, %303 in 1 : vector<2048x32xf32>, vector<2048x2xf32> -> vector<2048x34xf32>
    %c5_131 = arith.constant 5 : index
    %c0_132 = arith.constant 0 : index
    %305 = vector.load %arg6[%c5_131, %c0_132] : memref<11x128xf32, #tpu.memory_space<vmem>>, vector<1x32xf32>
    %cst_133 = arith.constant 0.000000e+00 : f32
    %306 = vector.broadcast %cst_133 : f32 to vector<2048x32xf32>
    %307 = vector.broadcast %305 : vector<1x32xf32> to vector<2048x32xf32>
    %308 = arith.addf %306, %307 : vector<2048x32xf32>
    %c0_134 = arith.constant 0 : index
    %c0_135 = arith.constant 0 : index
    %c0_136 = arith.constant 0 : index
    %309 = vector.load %arg4[%c0_134, %c0_135, %c0_136] : memref<9x34x32xf32, #tpu.memory_space<vmem>>, vector<1x34x32xf32>
    %310 = vector.shape_cast %309 : vector<1x34x32xf32> to vector<34x32xf32>
    %cst_137 = arith.constant dense<0.000000e+00> : vector<2048x32xf32>
    %311 = tpu.matmul %304, %310, %cst_137 {dimension_numbers = #tpu.dot_dimension_numbers<[1], [0], [0], [1], [0, 0, 1, 1], [], []>} : vector<2048x34xf32>, vector<34x32xf32>, vector<2048x32xf32> -> vector<2048x32xf32>
    %cst_138 = arith.constant 0.000000e+00 : f32
    %312 = vector.broadcast %cst_138 : f32 to vector<24x32xf32>
    %313 = tpu.concatenate %312, %311, %312 in 0 : vector<24x32xf32>, vector<2048x32xf32>, vector<24x32xf32> -> vector<2096x32xf32>
    %314 = vector.extract_strided_slice %313 {offsets = [7, 0], sizes = [2048, 32], strides = [1, 1]} : vector<2096x32xf32> to vector<2048x32xf32>
    %cst_139 = arith.constant 0.000000e+00 : f32
    %315 = vector.shape_cast %39 : vector<2048x1xi1> to vector<2048x1xi1>
    %316 = vector.broadcast %315 : vector<2048x1xi1> to vector<2048x32xi1>
    %317 = vector.broadcast %cst_139 : f32 to vector<2048x32xf32>
    %318 = arith.select %316, %314, %317 : vector<2048x32xi1>, vector<2048x32xf32>
    %319 = arith.addf %308, %318 : vector<2048x32xf32>
    %c1_140 = arith.constant 1 : index
    %c0_141 = arith.constant 0 : index
    %c0_142 = arith.constant 0 : index
    %320 = vector.load %arg4[%c1_140, %c0_141, %c0_142] : memref<9x34x32xf32, #tpu.memory_space<vmem>>, vector<1x34x32xf32>
    %321 = vector.shape_cast %320 : vector<1x34x32xf32> to vector<34x32xf32>
    %cst_143 = arith.constant dense<0.000000e+00> : vector<2048x32xf32>
    %322 = tpu.matmul %304, %321, %cst_143 {dimension_numbers = #tpu.dot_dimension_numbers<[1], [0], [0], [1], [0, 0, 1, 1], [], []>} : vector<2048x34xf32>, vector<34x32xf32>, vector<2048x32xf32> -> vector<2048x32xf32>
    %cst_144 = arith.constant 0.000000e+00 : f32
    %323 = vector.broadcast %cst_144 : f32 to vector<24x32xf32>
    %324 = tpu.concatenate %323, %322, %323 in 0 : vector<24x32xf32>, vector<2048x32xf32>, vector<24x32xf32> -> vector<2096x32xf32>
    %325 = vector.extract_strided_slice %324 {offsets = [8, 0], sizes = [2048, 32], strides = [1, 1]} : vector<2096x32xf32> to vector<2048x32xf32>
    %cst_145 = arith.constant 0.000000e+00 : f32
    %326 = vector.shape_cast %58 : vector<2048x1xi1> to vector<2048x1xi1>
    %327 = vector.broadcast %326 : vector<2048x1xi1> to vector<2048x32xi1>
    %328 = vector.broadcast %cst_145 : f32 to vector<2048x32xf32>
    %329 = arith.select %327, %325, %328 : vector<2048x32xi1>, vector<2048x32xf32>
    %330 = arith.addf %319, %329 : vector<2048x32xf32>
    %c2_146 = arith.constant 2 : index
    %c0_147 = arith.constant 0 : index
    %c0_148 = arith.constant 0 : index
    %331 = vector.load %arg4[%c2_146, %c0_147, %c0_148] : memref<9x34x32xf32, #tpu.memory_space<vmem>>, vector<1x34x32xf32>
    %332 = vector.shape_cast %331 : vector<1x34x32xf32> to vector<34x32xf32>
    %cst_149 = arith.constant dense<0.000000e+00> : vector<2048x32xf32>
    %333 = tpu.matmul %304, %332, %cst_149 {dimension_numbers = #tpu.dot_dimension_numbers<[1], [0], [0], [1], [0, 0, 1, 1], [], []>} : vector<2048x34xf32>, vector<34x32xf32>, vector<2048x32xf32> -> vector<2048x32xf32>
    %cst_150 = arith.constant 0.000000e+00 : f32
    %334 = vector.broadcast %cst_150 : f32 to vector<24x32xf32>
    %335 = tpu.concatenate %334, %333, %334 in 0 : vector<24x32xf32>, vector<2048x32xf32>, vector<24x32xf32> -> vector<2096x32xf32>
    %336 = vector.extract_strided_slice %335 {offsets = [9, 0], sizes = [2048, 32], strides = [1, 1]} : vector<2096x32xf32> to vector<2048x32xf32>
    %cst_151 = arith.constant 0.000000e+00 : f32
    %337 = vector.shape_cast %77 : vector<2048x1xi1> to vector<2048x1xi1>
    %338 = vector.broadcast %337 : vector<2048x1xi1> to vector<2048x32xi1>
    %339 = vector.broadcast %cst_151 : f32 to vector<2048x32xf32>
    %340 = arith.select %338, %336, %339 : vector<2048x32xi1>, vector<2048x32xf32>
    %341 = arith.addf %330, %340 : vector<2048x32xf32>
    %c3_152 = arith.constant 3 : index
    %c0_153 = arith.constant 0 : index
    %c0_154 = arith.constant 0 : index
    %342 = vector.load %arg4[%c3_152, %c0_153, %c0_154] : memref<9x34x32xf32, #tpu.memory_space<vmem>>, vector<1x34x32xf32>
    %343 = vector.shape_cast %342 : vector<1x34x32xf32> to vector<34x32xf32>
    %cst_155 = arith.constant dense<0.000000e+00> : vector<2048x32xf32>
    %344 = tpu.matmul %304, %343, %cst_155 {dimension_numbers = #tpu.dot_dimension_numbers<[1], [0], [0], [1], [0, 0, 1, 1], [], []>} : vector<2048x34xf32>, vector<34x32xf32>, vector<2048x32xf32> -> vector<2048x32xf32>
    %cst_156 = arith.constant 0.000000e+00 : f32
    %345 = vector.broadcast %cst_156 : f32 to vector<24x32xf32>
    %346 = tpu.concatenate %345, %344, %345 in 0 : vector<24x32xf32>, vector<2048x32xf32>, vector<24x32xf32> -> vector<2096x32xf32>
    %347 = vector.extract_strided_slice %346 {offsets = [23, 0], sizes = [2048, 32], strides = [1, 1]} : vector<2096x32xf32> to vector<2048x32xf32>
    %cst_157 = arith.constant 0.000000e+00 : f32
    %348 = vector.shape_cast %96 : vector<2048x1xi1> to vector<2048x1xi1>
    %349 = vector.broadcast %348 : vector<2048x1xi1> to vector<2048x32xi1>
    %350 = vector.broadcast %cst_157 : f32 to vector<2048x32xf32>
    %351 = arith.select %349, %347, %350 : vector<2048x32xi1>, vector<2048x32xf32>
    %352 = arith.addf %341, %351 : vector<2048x32xf32>
    %c4_158 = arith.constant 4 : index
    %c0_159 = arith.constant 0 : index
    %c0_160 = arith.constant 0 : index
    %353 = vector.load %arg4[%c4_158, %c0_159, %c0_160] : memref<9x34x32xf32, #tpu.memory_space<vmem>>, vector<1x34x32xf32>
    %354 = vector.shape_cast %353 : vector<1x34x32xf32> to vector<34x32xf32>
    %cst_161 = arith.constant dense<0.000000e+00> : vector<2048x32xf32>
    %355 = tpu.matmul %304, %354, %cst_161 {dimension_numbers = #tpu.dot_dimension_numbers<[1], [0], [0], [1], [0, 0, 1, 1], [], []>} : vector<2048x34xf32>, vector<34x32xf32>, vector<2048x32xf32> -> vector<2048x32xf32>
    %cst_162 = arith.constant 0.000000e+00 : f32
    %356 = vector.shape_cast %115 : vector<2048x1xi1> to vector<2048x1xi1>
    %357 = vector.broadcast %356 : vector<2048x1xi1> to vector<2048x32xi1>
    %358 = vector.broadcast %cst_162 : f32 to vector<2048x32xf32>
    %359 = arith.select %357, %355, %358 : vector<2048x32xi1>, vector<2048x32xf32>
    %360 = arith.addf %352, %359 : vector<2048x32xf32>
    %c5_163 = arith.constant 5 : index
    %c0_164 = arith.constant 0 : index
    %c0_165 = arith.constant 0 : index
    %361 = vector.load %arg4[%c5_163, %c0_164, %c0_165] : memref<9x34x32xf32, #tpu.memory_space<vmem>>, vector<1x34x32xf32>
    %362 = vector.shape_cast %361 : vector<1x34x32xf32> to vector<34x32xf32>
    %cst_166 = arith.constant dense<0.000000e+00> : vector<2048x32xf32>
    %363 = tpu.matmul %304, %362, %cst_166 {dimension_numbers = #tpu.dot_dimension_numbers<[1], [0], [0], [1], [0, 0, 1, 1], [], []>} : vector<2048x34xf32>, vector<34x32xf32>, vector<2048x32xf32> -> vector<2048x32xf32>
    %cst_167 = arith.constant 0.000000e+00 : f32
    %364 = vector.broadcast %cst_167 : f32 to vector<24x32xf32>
    %365 = tpu.concatenate %364, %363, %364 in 0 : vector<24x32xf32>, vector<2048x32xf32>, vector<24x32xf32> -> vector<2096x32xf32>
    %366 = vector.extract_strided_slice %365 {offsets = [25, 0], sizes = [2048, 32], strides = [1, 1]} : vector<2096x32xf32> to vector<2048x32xf32>
    %cst_168 = arith.constant 0.000000e+00 : f32
    %367 = vector.shape_cast %134 : vector<2048x1xi1> to vector<2048x1xi1>
    %368 = vector.broadcast %367 : vector<2048x1xi1> to vector<2048x32xi1>
    %369 = vector.broadcast %cst_168 : f32 to vector<2048x32xf32>
    %370 = arith.select %368, %366, %369 : vector<2048x32xi1>, vector<2048x32xf32>
    %371 = arith.addf %360, %370 : vector<2048x32xf32>
    %c6_169 = arith.constant 6 : index
    %c0_170 = arith.constant 0 : index
    %c0_171 = arith.constant 0 : index
    %372 = vector.load %arg4[%c6_169, %c0_170, %c0_171] : memref<9x34x32xf32, #tpu.memory_space<vmem>>, vector<1x34x32xf32>
    %373 = vector.shape_cast %372 : vector<1x34x32xf32> to vector<34x32xf32>
    %cst_172 = arith.constant dense<0.000000e+00> : vector<2048x32xf32>
    %374 = tpu.matmul %304, %373, %cst_172 {dimension_numbers = #tpu.dot_dimension_numbers<[1], [0], [0], [1], [0, 0, 1, 1], [], []>} : vector<2048x34xf32>, vector<34x32xf32>, vector<2048x32xf32> -> vector<2048x32xf32>
    %cst_173 = arith.constant 0.000000e+00 : f32
    %375 = vector.broadcast %cst_173 : f32 to vector<24x32xf32>
    %376 = tpu.concatenate %375, %374, %375 in 0 : vector<24x32xf32>, vector<2048x32xf32>, vector<24x32xf32> -> vector<2096x32xf32>
    %377 = vector.extract_strided_slice %376 {offsets = [39, 0], sizes = [2048, 32], strides = [1, 1]} : vector<2096x32xf32> to vector<2048x32xf32>
    %cst_174 = arith.constant 0.000000e+00 : f32
    %378 = vector.shape_cast %153 : vector<2048x1xi1> to vector<2048x1xi1>
    %379 = vector.broadcast %378 : vector<2048x1xi1> to vector<2048x32xi1>
    %380 = vector.broadcast %cst_174 : f32 to vector<2048x32xf32>
    %381 = arith.select %379, %377, %380 : vector<2048x32xi1>, vector<2048x32xf32>
    %382 = arith.addf %371, %381 : vector<2048x32xf32>
    %c7_175 = arith.constant 7 : index
    %c0_176 = arith.constant 0 : index
    %c0_177 = arith.constant 0 : index
    %383 = vector.load %arg4[%c7_175, %c0_176, %c0_177] : memref<9x34x32xf32, #tpu.memory_space<vmem>>, vector<1x34x32xf32>
    %384 = vector.shape_cast %383 : vector<1x34x32xf32> to vector<34x32xf32>
    %cst_178 = arith.constant dense<0.000000e+00> : vector<2048x32xf32>
    %385 = tpu.matmul %304, %384, %cst_178 {dimension_numbers = #tpu.dot_dimension_numbers<[1], [0], [0], [1], [0, 0, 1, 1], [], []>} : vector<2048x34xf32>, vector<34x32xf32>, vector<2048x32xf32> -> vector<2048x32xf32>
    %cst_179 = arith.constant 0.000000e+00 : f32
    %386 = vector.broadcast %cst_179 : f32 to vector<24x32xf32>
    %387 = tpu.concatenate %386, %385, %386 in 0 : vector<24x32xf32>, vector<2048x32xf32>, vector<24x32xf32> -> vector<2096x32xf32>
    %388 = vector.extract_strided_slice %387 {offsets = [40, 0], sizes = [2048, 32], strides = [1, 1]} : vector<2096x32xf32> to vector<2048x32xf32>
    %cst_180 = arith.constant 0.000000e+00 : f32
    %389 = vector.shape_cast %172 : vector<2048x1xi1> to vector<2048x1xi1>
    %390 = vector.broadcast %389 : vector<2048x1xi1> to vector<2048x32xi1>
    %391 = vector.broadcast %cst_180 : f32 to vector<2048x32xf32>
    %392 = arith.select %390, %388, %391 : vector<2048x32xi1>, vector<2048x32xf32>
    %393 = arith.addf %382, %392 : vector<2048x32xf32>
    %c8_181 = arith.constant 8 : index
    %c0_182 = arith.constant 0 : index
    %c0_183 = arith.constant 0 : index
    %394 = vector.load %arg4[%c8_181, %c0_182, %c0_183] : memref<9x34x32xf32, #tpu.memory_space<vmem>>, vector<1x34x32xf32>
    %395 = vector.shape_cast %394 : vector<1x34x32xf32> to vector<34x32xf32>
    %cst_184 = arith.constant dense<0.000000e+00> : vector<2048x32xf32>
    %396 = tpu.matmul %304, %395, %cst_184 {dimension_numbers = #tpu.dot_dimension_numbers<[1], [0], [0], [1], [0, 0, 1, 1], [], []>} : vector<2048x34xf32>, vector<34x32xf32>, vector<2048x32xf32> -> vector<2048x32xf32>
    %cst_185 = arith.constant 0.000000e+00 : f32
    %397 = vector.broadcast %cst_185 : f32 to vector<24x32xf32>
    %398 = tpu.concatenate %397, %396, %397 in 0 : vector<24x32xf32>, vector<2048x32xf32>, vector<24x32xf32> -> vector<2096x32xf32>
    %399 = vector.extract_strided_slice %398 {offsets = [41, 0], sizes = [2048, 32], strides = [1, 1]} : vector<2096x32xf32> to vector<2048x32xf32>
    %cst_186 = arith.constant 0.000000e+00 : f32
    %400 = vector.shape_cast %191 : vector<2048x1xi1> to vector<2048x1xi1>
    %401 = vector.broadcast %400 : vector<2048x1xi1> to vector<2048x32xi1>
    %402 = vector.broadcast %cst_186 : f32 to vector<2048x32xf32>
    %403 = arith.select %401, %399, %402 : vector<2048x32xi1>, vector<2048x32xf32>
    %404 = arith.addf %393, %403 : vector<2048x32xf32>
    %cst_187 = arith.constant 0.000000e+00 : f32
    %405 = vector.broadcast %cst_187 : f32 to vector<2048x32xf32>
    %406 = arith.cmpf ogt, %404, %405 : vector<2048x32xf32>
    %cst_188 = arith.constant 0.00999999977 : f32
    %407 = vector.broadcast %cst_188 : f32 to vector<2048x32xf32>
    %408 = arith.mulf %407, %404 : vector<2048x32xf32>
    %409 = arith.select %406, %404, %408 : vector<2048x32xi1>, vector<2048x32xf32>
    %c6_189 = arith.constant 6 : index
    %c0_190 = arith.constant 0 : index
    %410 = vector.load %arg6[%c6_189, %c0_190] : memref<11x128xf32, #tpu.memory_space<vmem>>, vector<1x32xf32>
    %411 = vector.broadcast %410 : vector<1x32xf32> to vector<2048x32xf32>
    %412 = arith.mulf %409, %411 : vector<2048x32xf32>
    %c7_191 = arith.constant 7 : index
    %c0_192 = arith.constant 0 : index
    %413 = vector.load %arg6[%c7_191, %c0_192] : memref<11x128xf32, #tpu.memory_space<vmem>>, vector<1x32xf32>
    %414 = vector.broadcast %413 : vector<1x32xf32> to vector<2048x32xf32>
    %415 = arith.addf %412, %414 : vector<2048x32xf32>
    %416 = arith.addf %415, %302 : vector<2048x32xf32>
    %cst_193 = arith.constant 0.000000e+00 : f32
    %417 = vector.broadcast %cst_193 : f32 to vector<2048x32xf32>
    %c0_194 = arith.constant 0 : index
    %c0_195 = arith.constant 0 : index
    %c0_196 = arith.constant 0 : index
    %418 = vector.load %arg5[%c0_194, %c0_195, %c0_196] : memref<4x32x32xf32, #tpu.memory_space<vmem>>, vector<1x32x32xf32>
    %419 = vector.shape_cast %418 : vector<1x32x32xf32> to vector<32x32xf32>
    %cst_197 = arith.constant dense<0.000000e+00> : vector<2048x32xf32>
    %420 = tpu.matmul %416, %419, %cst_197 {dimension_numbers = #tpu.dot_dimension_numbers<[1], [0], [0], [1], [0, 0, 1, 1], [], []>} : vector<2048x32xf32>, vector<32x32xf32>, vector<2048x32xf32> -> vector<2048x32xf32>
    %421 = arith.addf %417, %420 : vector<2048x32xf32>
    %c1_198 = arith.constant 1 : index
    %c0_199 = arith.constant 0 : index
    %c0_200 = arith.constant 0 : index
    %422 = vector.load %arg5[%c1_198, %c0_199, %c0_200] : memref<4x32x32xf32, #tpu.memory_space<vmem>>, vector<1x32x32xf32>
    %423 = vector.shape_cast %422 : vector<1x32x32xf32> to vector<32x32xf32>
    %cst_201 = arith.constant dense<0.000000e+00> : vector<2048x32xf32>
    %424 = tpu.matmul %416, %423, %cst_201 {dimension_numbers = #tpu.dot_dimension_numbers<[1], [0], [0], [1], [0, 0, 1, 1], [], []>} : vector<2048x32xf32>, vector<32x32xf32>, vector<2048x32xf32> -> vector<2048x32xf32>
    %cst_202 = arith.constant 0.000000e+00 : f32
    %425 = vector.broadcast %cst_202 : f32 to vector<24x32xf32>
    %426 = tpu.concatenate %425, %424, %425 in 0 : vector<24x32xf32>, vector<2048x32xf32>, vector<24x32xf32> -> vector<2096x32xf32>
    %427 = vector.extract_strided_slice %426 {offsets = [25, 0], sizes = [2048, 32], strides = [1, 1]} : vector<2096x32xf32> to vector<2048x32xf32>
    %428 = arith.addf %421, %427 : vector<2048x32xf32>
    %c2_203 = arith.constant 2 : index
    %c0_204 = arith.constant 0 : index
    %c0_205 = arith.constant 0 : index
    %429 = vector.load %arg5[%c2_203, %c0_204, %c0_205] : memref<4x32x32xf32, #tpu.memory_space<vmem>>, vector<1x32x32xf32>
    %430 = vector.shape_cast %429 : vector<1x32x32xf32> to vector<32x32xf32>
    %cst_206 = arith.constant dense<0.000000e+00> : vector<2048x32xf32>
    %431 = tpu.matmul %416, %430, %cst_206 {dimension_numbers = #tpu.dot_dimension_numbers<[1], [0], [0], [1], [0, 0, 1, 1], [], []>} : vector<2048x32xf32>, vector<32x32xf32>, vector<2048x32xf32> -> vector<2048x32xf32>
    %cst_207 = arith.constant 0.000000e+00 : f32
    %432 = vector.broadcast %cst_207 : f32 to vector<24x32xf32>
    %433 = tpu.concatenate %432, %431, %432 in 0 : vector<24x32xf32>, vector<2048x32xf32>, vector<24x32xf32> -> vector<2096x32xf32>
    %434 = vector.extract_strided_slice %433 {offsets = [40, 0], sizes = [2048, 32], strides = [1, 1]} : vector<2096x32xf32> to vector<2048x32xf32>
    %435 = arith.addf %428, %434 : vector<2048x32xf32>
    %c3_208 = arith.constant 3 : index
    %c0_209 = arith.constant 0 : index
    %c0_210 = arith.constant 0 : index
    %436 = vector.load %arg5[%c3_208, %c0_209, %c0_210] : memref<4x32x32xf32, #tpu.memory_space<vmem>>, vector<1x32x32xf32>
    %437 = vector.shape_cast %436 : vector<1x32x32xf32> to vector<32x32xf32>
    %cst_211 = arith.constant dense<0.000000e+00> : vector<2048x32xf32>
    %438 = tpu.matmul %416, %437, %cst_211 {dimension_numbers = #tpu.dot_dimension_numbers<[1], [0], [0], [1], [0, 0, 1, 1], [], []>} : vector<2048x32xf32>, vector<32x32xf32>, vector<2048x32xf32> -> vector<2048x32xf32>
    %cst_212 = arith.constant 0.000000e+00 : f32
    %439 = vector.broadcast %cst_212 : f32 to vector<24x32xf32>
    %440 = tpu.concatenate %439, %438, %439 in 0 : vector<24x32xf32>, vector<2048x32xf32>, vector<24x32xf32> -> vector<2096x32xf32>
    %441 = vector.extract_strided_slice %440 {offsets = [41, 0], sizes = [2048, 32], strides = [1, 1]} : vector<2096x32xf32> to vector<2048x32xf32>
    %442 = arith.addf %435, %441 : vector<2048x32xf32>
    %c0_213 = arith.constant 0 : index
    %c0_214 = arith.constant 0 : index
    %443 = vector.load %arg7[%c0_213, %c0_214] : memref<64x256xf32, #tpu.memory_space<vmem>>, vector<64x256xf32>
    %444 = vector.extract_strided_slice %442 {offsets = [0, 0], sizes = [256, 32], strides = [1, 1]} : vector<2048x32xf32> to vector<256x32xf32>
    %cst_215 = arith.constant dense<0.000000e+00> : vector<64x32xf32>
    %445 = tpu.matmul %443, %444, %cst_215 {dimension_numbers = #tpu.dot_dimension_numbers<[1], [0], [0], [1], [0, 0, 1, 1], [], []>} : vector<64x256xf32>, vector<256x32xf32>, vector<64x32xf32> -> vector<64x32xf32>
    %c8_216 = arith.constant 8 : index
    %c0_217 = arith.constant 0 : index
    %446 = vector.load %arg6[%c8_216, %c0_217] : memref<11x128xf32, #tpu.memory_space<vmem>>, vector<1x32xf32>
    %447 = vector.broadcast %446 : vector<1x32xf32> to vector<64x32xf32>
    %448 = arith.addf %445, %447 : vector<64x32xf32>
    %cst_218 = arith.constant 0.000000e+00 : f32
    %449 = vector.broadcast %cst_218 : f32 to vector<64x32xf32>
    %450 = arith.cmpf ogt, %448, %449 : vector<64x32xf32>
    %cst_219 = arith.constant 0.00999999977 : f32
    %451 = vector.broadcast %cst_219 : f32 to vector<64x32xf32>
    %452 = arith.mulf %451, %448 : vector<64x32xf32>
    %453 = arith.select %450, %448, %452 : vector<64x32xi1>, vector<64x32xf32>
    %c9 = arith.constant 9 : index
    %c0_220 = arith.constant 0 : index
    %454 = vector.load %arg6[%c9, %c0_220] : memref<11x128xf32, #tpu.memory_space<vmem>>, vector<1x32xf32>
    %455 = vector.broadcast %454 : vector<1x32xf32> to vector<64x32xf32>
    %456 = arith.mulf %453, %455 : vector<64x32xf32>
    %c10 = arith.constant 10 : index
    %c0_221 = arith.constant 0 : index
    %457 = vector.load %arg6[%c10, %c0_221] : memref<11x128xf32, #tpu.memory_space<vmem>>, vector<1x32xf32>
    %458 = vector.broadcast %457 : vector<1x32xf32> to vector<64x32xf32>
    %459 = arith.addf %456, %458 : vector<64x32xf32>
    %c0_222 = arith.constant 0 : index
    %c0_223 = arith.constant 0 : index
    %460 = vector.load %arg8[%c0_222, %c0_223] : memref<512x32xf32, #tpu.memory_space<vmem>>, vector<64x32xf32>
    tpu.vector_store %arg8[%c0_222, %c0_223], %459 {strides = array<i32>} : memref<512x32xf32, #tpu.memory_space<vmem>>, vector<64x32xf32>,
    %461 = vector.extract_strided_slice %442 {offsets = [256, 0], sizes = [256, 32], strides = [1, 1]} : vector<2048x32xf32> to vector<256x32xf32>
    %cst_224 = arith.constant dense<0.000000e+00> : vector<64x32xf32>
    %462 = tpu.matmul %443, %461, %cst_224 {dimension_numbers = #tpu.dot_dimension_numbers<[1], [0], [0], [1], [0, 0, 1, 1], [], []>} : vector<64x256xf32>, vector<256x32xf32>, vector<64x32xf32> -> vector<64x32xf32>
    %c8_225 = arith.constant 8 : index
    %c0_226 = arith.constant 0 : index
    %463 = vector.load %arg6[%c8_225, %c0_226] : memref<11x128xf32, #tpu.memory_space<vmem>>, vector<1x32xf32>
    %464 = vector.broadcast %463 : vector<1x32xf32> to vector<64x32xf32>
    %465 = arith.addf %462, %464 : vector<64x32xf32>
    %cst_227 = arith.constant 0.000000e+00 : f32
    %466 = vector.broadcast %cst_227 : f32 to vector<64x32xf32>
    %467 = arith.cmpf ogt, %465, %466 : vector<64x32xf32>
    %cst_228 = arith.constant 0.00999999977 : f32
    %468 = vector.broadcast %cst_228 : f32 to vector<64x32xf32>
    %469 = arith.mulf %468, %465 : vector<64x32xf32>
    %470 = arith.select %467, %465, %469 : vector<64x32xi1>, vector<64x32xf32>
    %c9_229 = arith.constant 9 : index
    %c0_230 = arith.constant 0 : index
    %471 = vector.load %arg6[%c9_229, %c0_230] : memref<11x128xf32, #tpu.memory_space<vmem>>, vector<1x32xf32>
    %472 = vector.broadcast %471 : vector<1x32xf32> to vector<64x32xf32>
    %473 = arith.mulf %470, %472 : vector<64x32xf32>
    %c10_231 = arith.constant 10 : index
    %c0_232 = arith.constant 0 : index
    %474 = vector.load %arg6[%c10_231, %c0_232] : memref<11x128xf32, #tpu.memory_space<vmem>>, vector<1x32xf32>
    %475 = vector.broadcast %474 : vector<1x32xf32> to vector<64x32xf32>
    %476 = arith.addf %473, %475 : vector<64x32xf32>
    %c64 = arith.constant 64 : index
    %c0_233 = arith.constant 0 : index
    %477 = vector.load %arg8[%c64, %c0_233] : memref<512x32xf32, #tpu.memory_space<vmem>>, vector<64x32xf32>
    tpu.vector_store %arg8[%c64, %c0_233], %476 {strides = array<i32>} : memref<512x32xf32, #tpu.memory_space<vmem>>, vector<64x32xf32>,
    %478 = vector.extract_strided_slice %442 {offsets = [512, 0], sizes = [256, 32], strides = [1, 1]} : vector<2048x32xf32> to vector<256x32xf32>
    %cst_234 = arith.constant dense<0.000000e+00> : vector<64x32xf32>
    %479 = tpu.matmul %443, %478, %cst_234 {dimension_numbers = #tpu.dot_dimension_numbers<[1], [0], [0], [1], [0, 0, 1, 1], [], []>} : vector<64x256xf32>, vector<256x32xf32>, vector<64x32xf32> -> vector<64x32xf32>
    %c8_235 = arith.constant 8 : index
    %c0_236 = arith.constant 0 : index
    %480 = vector.load %arg6[%c8_235, %c0_236] : memref<11x128xf32, #tpu.memory_space<vmem>>, vector<1x32xf32>
    %481 = vector.broadcast %480 : vector<1x32xf32> to vector<64x32xf32>
    %482 = arith.addf %479, %481 : vector<64x32xf32>
    %cst_237 = arith.constant 0.000000e+00 : f32
    %483 = vector.broadcast %cst_237 : f32 to vector<64x32xf32>
    %484 = arith.cmpf ogt, %482, %483 : vector<64x32xf32>
    %cst_238 = arith.constant 0.00999999977 : f32
    %485 = vector.broadcast %cst_238 : f32 to vector<64x32xf32>
    %486 = arith.mulf %485, %482 : vector<64x32xf32>
    %487 = arith.select %484, %482, %486 : vector<64x32xi1>, vector<64x32xf32>
    %c9_239 = arith.constant 9 : index
    %c0_240 = arith.constant 0 : index
    %488 = vector.load %arg6[%c9_239, %c0_240] : memref<11x128xf32, #tpu.memory_space<vmem>>, vector<1x32xf32>
    %489 = vector.broadcast %488 : vector<1x32xf32> to vector<64x32xf32>
    %490 = arith.mulf %487, %489 : vector<64x32xf32>
    %c10_241 = arith.constant 10 : index
    %c0_242 = arith.constant 0 : index
    %491 = vector.load %arg6[%c10_241, %c0_242] : memref<11x128xf32, #tpu.memory_space<vmem>>, vector<1x32xf32>
    %492 = vector.broadcast %491 : vector<1x32xf32> to vector<64x32xf32>
    %493 = arith.addf %490, %492 : vector<64x32xf32>
    %c128 = arith.constant 128 : index
    %c0_243 = arith.constant 0 : index
    %494 = vector.load %arg8[%c128, %c0_243] : memref<512x32xf32, #tpu.memory_space<vmem>>, vector<64x32xf32>
    tpu.vector_store %arg8[%c128, %c0_243], %493 {strides = array<i32>} : memref<512x32xf32, #tpu.memory_space<vmem>>, vector<64x32xf32>,
    %495 = vector.extract_strided_slice %442 {offsets = [768, 0], sizes = [256, 32], strides = [1, 1]} : vector<2048x32xf32> to vector<256x32xf32>
    %cst_244 = arith.constant dense<0.000000e+00> : vector<64x32xf32>
    %496 = tpu.matmul %443, %495, %cst_244 {dimension_numbers = #tpu.dot_dimension_numbers<[1], [0], [0], [1], [0, 0, 1, 1], [], []>} : vector<64x256xf32>, vector<256x32xf32>, vector<64x32xf32> -> vector<64x32xf32>
    %c8_245 = arith.constant 8 : index
    %c0_246 = arith.constant 0 : index
    %497 = vector.load %arg6[%c8_245, %c0_246] : memref<11x128xf32, #tpu.memory_space<vmem>>, vector<1x32xf32>
    %498 = vector.broadcast %497 : vector<1x32xf32> to vector<64x32xf32>
    %499 = arith.addf %496, %498 : vector<64x32xf32>
    %cst_247 = arith.constant 0.000000e+00 : f32
    %500 = vector.broadcast %cst_247 : f32 to vector<64x32xf32>
    %501 = arith.cmpf ogt, %499, %500 : vector<64x32xf32>
    %cst_248 = arith.constant 0.00999999977 : f32
    %502 = vector.broadcast %cst_248 : f32 to vector<64x32xf32>
    %503 = arith.mulf %502, %499 : vector<64x32xf32>
    %504 = arith.select %501, %499, %503 : vector<64x32xi1>, vector<64x32xf32>
    %c9_249 = arith.constant 9 : index
    %c0_250 = arith.constant 0 : index
    %505 = vector.load %arg6[%c9_249, %c0_250] : memref<11x128xf32, #tpu.memory_space<vmem>>, vector<1x32xf32>
    %506 = vector.broadcast %505 : vector<1x32xf32> to vector<64x32xf32>
    %507 = arith.mulf %504, %506 : vector<64x32xf32>
    %c10_251 = arith.constant 10 : index
    %c0_252 = arith.constant 0 : index
    %508 = vector.load %arg6[%c10_251, %c0_252] : memref<11x128xf32, #tpu.memory_space<vmem>>, vector<1x32xf32>
    %509 = vector.broadcast %508 : vector<1x32xf32> to vector<64x32xf32>
    %510 = arith.addf %507, %509 : vector<64x32xf32>
    %c192 = arith.constant 192 : index
    %c0_253 = arith.constant 0 : index
    %511 = vector.load %arg8[%c192, %c0_253] : memref<512x32xf32, #tpu.memory_space<vmem>>, vector<64x32xf32>
    tpu.vector_store %arg8[%c192, %c0_253], %510 {strides = array<i32>} : memref<512x32xf32, #tpu.memory_space<vmem>>, vector<64x32xf32>,
    %512 = vector.extract_strided_slice %442 {offsets = [1024, 0], sizes = [256, 32], strides = [1, 1]} : vector<2048x32xf32> to vector<256x32xf32>
    %cst_254 = arith.constant dense<0.000000e+00> : vector<64x32xf32>
    %513 = tpu.matmul %443, %512, %cst_254 {dimension_numbers = #tpu.dot_dimension_numbers<[1], [0], [0], [1], [0, 0, 1, 1], [], []>} : vector<64x256xf32>, vector<256x32xf32>, vector<64x32xf32> -> vector<64x32xf32>
    %c8_255 = arith.constant 8 : index
    %c0_256 = arith.constant 0 : index
    %514 = vector.load %arg6[%c8_255, %c0_256] : memref<11x128xf32, #tpu.memory_space<vmem>>, vector<1x32xf32>
    %515 = vector.broadcast %514 : vector<1x32xf32> to vector<64x32xf32>
    %516 = arith.addf %513, %515 : vector<64x32xf32>
    %cst_257 = arith.constant 0.000000e+00 : f32
    %517 = vector.broadcast %cst_257 : f32 to vector<64x32xf32>
    %518 = arith.cmpf ogt, %516, %517 : vector<64x32xf32>
    %cst_258 = arith.constant 0.00999999977 : f32
    %519 = vector.broadcast %cst_258 : f32 to vector<64x32xf32>
    %520 = arith.mulf %519, %516 : vector<64x32xf32>
    %521 = arith.select %518, %516, %520 : vector<64x32xi1>, vector<64x32xf32>
    %c9_259 = arith.constant 9 : index
    %c0_260 = arith.constant 0 : index
    %522 = vector.load %arg6[%c9_259, %c0_260] : memref<11x128xf32, #tpu.memory_space<vmem>>, vector<1x32xf32>
    %523 = vector.broadcast %522 : vector<1x32xf32> to vector<64x32xf32>
    %524 = arith.mulf %521, %523 : vector<64x32xf32>
    %c10_261 = arith.constant 10 : index
    %c0_262 = arith.constant 0 : index
    %525 = vector.load %arg6[%c10_261, %c0_262] : memref<11x128xf32, #tpu.memory_space<vmem>>, vector<1x32xf32>
    %526 = vector.broadcast %525 : vector<1x32xf32> to vector<64x32xf32>
    %527 = arith.addf %524, %526 : vector<64x32xf32>
    %c256 = arith.constant 256 : index
    %c0_263 = arith.constant 0 : index
    %528 = vector.load %arg8[%c256, %c0_263] : memref<512x32xf32, #tpu.memory_space<vmem>>, vector<64x32xf32>
    tpu.vector_store %arg8[%c256, %c0_263], %527 {strides = array<i32>} : memref<512x32xf32, #tpu.memory_space<vmem>>, vector<64x32xf32>,
    %529 = vector.extract_strided_slice %442 {offsets = [1280, 0], sizes = [256, 32], strides = [1, 1]} : vector<2048x32xf32> to vector<256x32xf32>
    %cst_264 = arith.constant dense<0.000000e+00> : vector<64x32xf32>
    %530 = tpu.matmul %443, %529, %cst_264 {dimension_numbers = #tpu.dot_dimension_numbers<[1], [0], [0], [1], [0, 0, 1, 1], [], []>} : vector<64x256xf32>, vector<256x32xf32>, vector<64x32xf32> -> vector<64x32xf32>
    %c8_265 = arith.constant 8 : index
    %c0_266 = arith.constant 0 : index
    %531 = vector.load %arg6[%c8_265, %c0_266] : memref<11x128xf32, #tpu.memory_space<vmem>>, vector<1x32xf32>
    %532 = vector.broadcast %531 : vector<1x32xf32> to vector<64x32xf32>
    %533 = arith.addf %530, %532 : vector<64x32xf32>
    %cst_267 = arith.constant 0.000000e+00 : f32
    %534 = vector.broadcast %cst_267 : f32 to vector<64x32xf32>
    %535 = arith.cmpf ogt, %533, %534 : vector<64x32xf32>
    %cst_268 = arith.constant 0.00999999977 : f32
    %536 = vector.broadcast %cst_268 : f32 to vector<64x32xf32>
    %537 = arith.mulf %536, %533 : vector<64x32xf32>
    %538 = arith.select %535, %533, %537 : vector<64x32xi1>, vector<64x32xf32>
    %c9_269 = arith.constant 9 : index
    %c0_270 = arith.constant 0 : index
    %539 = vector.load %arg6[%c9_269, %c0_270] : memref<11x128xf32, #tpu.memory_space<vmem>>, vector<1x32xf32>
    %540 = vector.broadcast %539 : vector<1x32xf32> to vector<64x32xf32>
    %541 = arith.mulf %538, %540 : vector<64x32xf32>
    %c10_271 = arith.constant 10 : index
    %c0_272 = arith.constant 0 : index
    %542 = vector.load %arg6[%c10_271, %c0_272] : memref<11x128xf32, #tpu.memory_space<vmem>>, vector<1x32xf32>
    %543 = vector.broadcast %542 : vector<1x32xf32> to vector<64x32xf32>
    %544 = arith.addf %541, %543 : vector<64x32xf32>
    %c320 = arith.constant 320 : index
    %c0_273 = arith.constant 0 : index
    %545 = vector.load %arg8[%c320, %c0_273] : memref<512x32xf32, #tpu.memory_space<vmem>>, vector<64x32xf32>
    tpu.vector_store %arg8[%c320, %c0_273], %544 {strides = array<i32>} : memref<512x32xf32, #tpu.memory_space<vmem>>, vector<64x32xf32>,
    %546 = vector.extract_strided_slice %442 {offsets = [1536, 0], sizes = [256, 32], strides = [1, 1]} : vector<2048x32xf32> to vector<256x32xf32>
    %cst_274 = arith.constant dense<0.000000e+00> : vector<64x32xf32>
    %547 = tpu.matmul %443, %546, %cst_274 {dimension_numbers = #tpu.dot_dimension_numbers<[1], [0], [0], [1], [0, 0, 1, 1], [], []>} : vector<64x256xf32>, vector<256x32xf32>, vector<64x32xf32> -> vector<64x32xf32>
    %c8_275 = arith.constant 8 : index
    %c0_276 = arith.constant 0 : index
    %548 = vector.load %arg6[%c8_275, %c0_276] : memref<11x128xf32, #tpu.memory_space<vmem>>, vector<1x32xf32>
    %549 = vector.broadcast %548 : vector<1x32xf32> to vector<64x32xf32>
    %550 = arith.addf %547, %549 : vector<64x32xf32>
    %cst_277 = arith.constant 0.000000e+00 : f32
    %551 = vector.broadcast %cst_277 : f32 to vector<64x32xf32>
    %552 = arith.cmpf ogt, %550, %551 : vector<64x32xf32>
    %cst_278 = arith.constant 0.00999999977 : f32
    %553 = vector.broadcast %cst_278 : f32 to vector<64x32xf32>
    %554 = arith.mulf %553, %550 : vector<64x32xf32>
    %555 = arith.select %552, %550, %554 : vector<64x32xi1>, vector<64x32xf32>
    %c9_279 = arith.constant 9 : index
    %c0_280 = arith.constant 0 : index
    %556 = vector.load %arg6[%c9_279, %c0_280] : memref<11x128xf32, #tpu.memory_space<vmem>>, vector<1x32xf32>
    %557 = vector.broadcast %556 : vector<1x32xf32> to vector<64x32xf32>
    %558 = arith.mulf %555, %557 : vector<64x32xf32>
    %c10_281 = arith.constant 10 : index
    %c0_282 = arith.constant 0 : index
    %559 = vector.load %arg6[%c10_281, %c0_282] : memref<11x128xf32, #tpu.memory_space<vmem>>, vector<1x32xf32>
    %560 = vector.broadcast %559 : vector<1x32xf32> to vector<64x32xf32>
    %561 = arith.addf %558, %560 : vector<64x32xf32>
    %c384 = arith.constant 384 : index
    %c0_283 = arith.constant 0 : index
    %562 = vector.load %arg8[%c384, %c0_283] : memref<512x32xf32, #tpu.memory_space<vmem>>, vector<64x32xf32>
    tpu.vector_store %arg8[%c384, %c0_283], %561 {strides = array<i32>} : memref<512x32xf32, #tpu.memory_space<vmem>>, vector<64x32xf32>,
    %563 = vector.extract_strided_slice %442 {offsets = [1792, 0], sizes = [256, 32], strides = [1, 1]} : vector<2048x32xf32> to vector<256x32xf32>
    %cst_284 = arith.constant dense<0.000000e+00> : vector<64x32xf32>
    %564 = tpu.matmul %443, %563, %cst_284 {dimension_numbers = #tpu.dot_dimension_numbers<[1], [0], [0], [1], [0, 0, 1, 1], [], []>} : vector<64x256xf32>, vector<256x32xf32>, vector<64x32xf32> -> vector<64x32xf32>
    %c8_285 = arith.constant 8 : index
    %c0_286 = arith.constant 0 : index
    %565 = vector.load %arg6[%c8_285, %c0_286] : memref<11x128xf32, #tpu.memory_space<vmem>>, vector<1x32xf32>
    %566 = vector.broadcast %565 : vector<1x32xf32> to vector<64x32xf32>
    %567 = arith.addf %564, %566 : vector<64x32xf32>
    %cst_287 = arith.constant 0.000000e+00 : f32
    %568 = vector.broadcast %cst_287 : f32 to vector<64x32xf32>
    %569 = arith.cmpf ogt, %567, %568 : vector<64x32xf32>
    %cst_288 = arith.constant 0.00999999977 : f32
    %570 = vector.broadcast %cst_288 : f32 to vector<64x32xf32>
    %571 = arith.mulf %570, %567 : vector<64x32xf32>
    %572 = arith.select %569, %567, %571 : vector<64x32xi1>, vector<64x32xf32>
    %c9_289 = arith.constant 9 : index
    %c0_290 = arith.constant 0 : index
    %573 = vector.load %arg6[%c9_289, %c0_290] : memref<11x128xf32, #tpu.memory_space<vmem>>, vector<1x32xf32>
    %574 = vector.broadcast %573 : vector<1x32xf32> to vector<64x32xf32>
    %575 = arith.mulf %572, %574 : vector<64x32xf32>
    %c10_291 = arith.constant 10 : index
    %c0_292 = arith.constant 0 : index
    %576 = vector.load %arg6[%c10_291, %c0_292] : memref<11x128xf32, #tpu.memory_space<vmem>>, vector<1x32xf32>
    %577 = vector.broadcast %576 : vector<1x32xf32> to vector<64x32xf32>
    %578 = arith.addf %575, %577 : vector<64x32xf32>
    %c448 = arith.constant 448 : index
    %c0_293 = arith.constant 0 : index
    %579 = vector.load %arg8[%c448, %c0_293] : memref<512x32xf32, #tpu.memory_space<vmem>>, vector<64x32xf32>
    tpu.vector_store %arg8[%c448, %c0_293], %578 {strides = array<i32>} : memref<512x32xf32, #tpu.memory_space<vmem>>, vector<64x32xf32>,
    return
  }
  func.func @transform_0(%arg0: i32) -> (i32, i32) {
    %c0_i32 = arith.constant 0 : i32
    %c0_i32_0 = arith.constant 0 : i32
    return %arg0, %c0_i32 : i32, i32
  }
  func.func @transform_1(%arg0: i32) -> (i32, i32) {
    %c0_i32 = arith.constant 0 : i32
    %c0_i32_0 = arith.constant 0 : i32
    %c0_i32_1 = arith.constant 0 : i32
    return %c0_i32, %c0_i32_0 : i32, i32
  }
  func.func @transform_2(%arg0: i32) -> (i32, i32, i32) {
    %c0_i32 = arith.constant 0 : i32
    %c0_i32_0 = arith.constant 0 : i32
    %c0_i32_1 = arith.constant 0 : i32
    %c0_i32_2 = arith.constant 0 : i32
    return %c0_i32, %c0_i32_0, %c0_i32_1 : i32, i32, i32
  }
  func.func @transform_3(%arg0: i32) -> (i32, i32, i32) {
    %c0_i32 = arith.constant 0 : i32
    %c0_i32_0 = arith.constant 0 : i32
    %c0_i32_1 = arith.constant 0 : i32
    %c0_i32_2 = arith.constant 0 : i32
    return %c0_i32, %c0_i32_0, %c0_i32_1 : i32, i32, i32
  }
  func.func @transform_4(%arg0: i32) -> (i32, i32, i32) {
    %c0_i32 = arith.constant 0 : i32
    %c0_i32_0 = arith.constant 0 : i32
    %c0_i32_1 = arith.constant 0 : i32
    %c0_i32_2 = arith.constant 0 : i32
    return %c0_i32, %c0_i32_0, %c0_i32_1 : i32, i32, i32
  }
  func.func @transform_5(%arg0: i32) -> (i32, i32) {
    %c0_i32 = arith.constant 0 : i32
    %c0_i32_0 = arith.constant 0 : i32
    %c0_i32_1 = arith.constant 0 : i32
    return %c0_i32, %c0_i32_0 : i32, i32
  }
  func.func @transform_6(%arg0: i32) -> (i32, i32) {
    %c0_i32 = arith.constant 0 : i32
    %c0_i32_0 = arith.constant 0 : i32
    %c0_i32_1 = arith.constant 0 : i32
    return %c0_i32, %c0_i32_0 : i32, i32
  }
  func.func @transform_7(%arg0: i32) -> (i32, i32) {
    %c0_i32 = arith.constant 0 : i32
    %c0_i32_0 = arith.constant 0 : i32
    return %arg0, %c0_i32 : i32, i32
  }
}

</mosaic_0001>

<llo_original>
// kernel: tpu_custom_call.1
$region0: #{tpu_custom_call.1}
  #allocation0 [shape = 'u32[]', space=smem, size = 0x4, offset = 0x4, fixed_abs, tag = 'smem constant byte address 0x4 - core index']
  #allocation1 [shape = 'u32[144,128]{1,0:T(1,128)}', space=vmem, size = 0x12000, scoped, tag = 'internal scratch']
  %s0 = inlined_call_operand.hbm [shape: f32[8,128], index: 0, kind: input, shape index: {}]
  %s1 = inlined_call_operand.hbm [shape: f32[8,128], index: 1, kind: output, shape index: {}]
  %s2 = sld [smem:[#allocation0]]
  $region18: #{tpu_custom_call.1} parent=0
    _
  %s4 = ssub.s32 1, %s2
  %s5 = scalar_select 0, %s4, %s2
  $region1: #{tpu_custom_call.1} parent=0
    #allocation2 [shape = 'u8[4096]{0}', space=vmem, size = 0x1000, scoped, tag = 'input window, operand 0, single buffered']
    #allocation3 [shape = 's32[1]{0}', space=sflag, size = 0x4, scoped, tag = 'scoped memory for tpu_custom_call.1']
    #allocation4 [shape = 's32[1]{0}', space=sflag, size = 0x4, scoped, tag = 'scoped memory for tpu_custom_call.1']
    #allocation5 [shape = 'u8[4096]{0}', space=vmem, size = 0x1000, scoped, tag = 'output window, operand 0, single buffered']
    %6 = vsyncpa [#allocation3], 0
    %7 = vsyncpa [#allocation4], 0
    // Predicated region
    $region2: #{tpu_custom_call.1} parent=1 // pred_check
      _
    $region3: #{tpu_custom_call.1} parent=1 // pred_check_branch
      %9 = sbr.rel (0) target = $region5
    $region4: #{tpu_custom_call.1} parent=1 // pred_region
      %s11 = ssub.s32 128, 128
      %12 = vsyncadd [#allocation3], %s11
      %s14 = sshll.u32 [#allocation2], 4
      %s15 = int_to_ptr.vmem [resolvable:$true] %s14
      %17 = dma.hbm_to_vmem [thread:$0]  %s0, 128, %s15, [#allocation3]
    $region5: #{tpu_custom_call.1} parent=1 // pred_fallthru
      _
    // Predicated region
    $region6: #{tpu_custom_call.1} parent=1 // pred_check
      _
    $region7: #{tpu_custom_call.1} parent=1 // pred_check_branch
      %19 = sbr.rel (0) target = $region9
    $region8: #{tpu_custom_call.1} parent=1 // pred_region
      %20 = dma.done [#allocation3], 128
    $region9: #{tpu_custom_call.1} parent=1 // pred_fallthru
      _
    %v21 = vld [vmem:[#allocation2] sm:$0xff]
    %v22 = vrot.slane %v21, 7
    %23 = vst [vmem:[#allocation5] sm:$0xff] %v22
    // Predicated region
    $region10: #{tpu_custom_call.1} parent=1 // pred_check
      _
    $region11: #{tpu_custom_call.1} parent=1 // pred_check_branch
      %25 = sbr.rel (0) target = $region13
    $region12: #{tpu_custom_call.1} parent=1 // pred_region
      %s27 = ssub.s32 128, 128
      %28 = vsyncadd [#allocation4], %s27
      %s30 = sshll.u32 [#allocation5], 4
      %s31 = int_to_ptr.vmem [resolvable:$true] %s30
      %33 = dma.vmem_to_hbm [thread:$0]  %s31, 128, %s1, [#allocation4]
    $region13: #{tpu_custom_call.1} parent=1 // pred_fallthru
      _
    // Predicated region
    $region14: #{tpu_custom_call.1} parent=1 // pred_check
      _
    $region15: #{tpu_custom_call.1} parent=1 // pred_check_branch
      %35 = sbr.rel (0) target = $region17
    $region16: #{tpu_custom_call.1} parent=1 // pred_region
      %36 = dma.done [#allocation4], 128
    $region17: #{tpu_custom_call.1} parent=1 // pred_fallthru
      _
    %37 = vsyncpa [#allocation3], 1
    %38 = vsyncpa [#allocation4], 1

</llo_original>
